<compile_context>
chip_gen: v5e
topology: v5e:2x2
jax: 0.10.0
libtpu: 0.0.40
codegen_flags: <defaults>
</compile_context>

<pallas_src>
import math
import jax
import jax.numpy as jnp
from jax.experimental import pallas as pl
from jax.experimental.pallas import tpu as pltpu

D_MODEL = 64
CONTEXT_LENGTH = 16
NUM_HEADS = 4
NUM_BLOCKS = 8
MAX_TOKEN_VALUE = 100          # synthetic small vocab (stand-in for tiktoken vocab)
VOCAB_PAD = 128                # lane-dense padded vocab for the LM head / logits
HEAD_SIZE = D_MODEL // NUM_HEADS
FFN_DIM = 4 * D_MODEL
LN_EPS = 1e-5


def _layernorm(x, g, b):
    # single-pass: one traversal computes sum and sum-of-squares
    inv_d = 1.0 / x.shape[-1]
    s = jnp.sum(x, axis=-1, keepdims=True)
    ss = jnp.sum(x * x, axis=-1, keepdims=True)
    mu = s * inv_d
    var = ss * inv_d - mu * mu
    return (x - mu) * jax.lax.rsqrt(var + LN_EPS) * g + b


def transformer_kernel(x_emb_ref, ln1g_ref, ln1b_ref, wqkv_ref, wp_ref, bp_ref,
                       ln2g_ref, ln2b_ref, w1_ref, b1_ref, w2_ref, b2_ref,
                       lnfg_ref, lnfb_ref, wout_ref, bout_ref,
                       logits_ref, x_scr):
    layer = pl.program_id(1)

    @pl.when(layer == 0)
    def _():
        x_scr[...] = x_emb_ref[...]          # start of a new batch row-block

    x = x_scr[...]                           # (T, D) f32 residual stream
    T = x.shape[0]
    H, HS = NUM_HEADS, HEAD_SIZE

    # additive causal bias (T, T) — a few VPU ops, rebuilt per step
    row = jax.lax.broadcasted_iota(jnp.int32, (T, T), 0)
    col = jax.lax.broadcasted_iota(jnp.int32, (T, T), 1)
    mask_bias = jnp.where(col <= row, 0.0, -1e30).astype(jnp.float32)

    # ---- multi-head causal self-attention on LN1(x) ----
    h = _layernorm(x, ln1g_ref[...], ln1b_ref[...])                        # (T, D) f32
    hb = jnp.broadcast_to(h.astype(jnp.bfloat16)[None], (H, T, D_MODEL))   # (H, T, D)
    qkv = jnp.einsum('htd,hdo->hto', hb, wqkv_ref[...],
                     preferred_element_type=jnp.float32)                   # (H, T, 3*HS)
    q = qkv[:, :, 0 * HS:1 * HS]      # 1/sqrt(HS) already folded into the Q weights
    k = qkv[:, :, 1 * HS:2 * HS]
    v = qkv[:, :, 2 * HS:3 * HS]

    sc = jnp.einsum('hte,hse->hts', q, k,
                    preferred_element_type=jnp.float32) + mask_bias[None]  # (H, T, T)
    sc = sc - jnp.max(sc, axis=-1, keepdims=True)
    p = jnp.exp(sc)
    p = p * pl.reciprocal(jnp.sum(p, axis=-1, keepdims=True), approx=False)
    out = jnp.einsum('hts,hse->hte', p, v,
                     preferred_element_type=jnp.float32)                   # (H, T, HS)

    # output projection: att_concat @ Wp == sum_h att_h @ Wp_h (no lane concat needed)
    proj = jnp.einsum('hte,hek->htk', out.astype(jnp.bfloat16), wp_ref[...],
                      preferred_element_type=jnp.float32)                  # (H, T, D)
    x = x + jnp.sum(proj, axis=0) + bp_ref[...]

    # ---- feed-forward on LN2(x) ----
    h2 = _layernorm(x, ln2g_ref[...], ln2b_ref[...])
    ff = jnp.dot(h2.astype(jnp.bfloat16), w1_ref[...],
                 preferred_element_type=jnp.float32) + b1_ref[...]
    ff = jnp.maximum(ff, 0.0)
    ff = jnp.dot(ff.astype(jnp.bfloat16), w2_ref[...],
                 preferred_element_type=jnp.float32) + b2_ref[...]
    x = x + ff

    x_scr[...] = x

    # ---- final LayerNorm + LM head (lane-padded vocab) on the last layer ----
    @pl.when(layer == pl.num_programs(1) - 1)
    def _():
        xf = _layernorm(x, lnfg_ref[...], lnfb_ref[...])
        logits_ref[...] = (jnp.dot(xf.astype(jnp.bfloat16), wout_ref[...],
                                   preferred_element_type=jnp.float32)
                           + bout_ref[...])


def init_params(key):
    keys = jax.random.split(key, 8)

    def nrm(k, shape, scale=0.02):
        return scale * jax.random.normal(k, shape, jnp.float32)

    L, D, F, V = NUM_BLOCKS, D_MODEL, FFN_DIM, MAX_TOKEN_VALUE
    return dict(
        embedding=nrm(keys[0], (V + 1, D)),
        ln1g=jnp.ones((L, 1, D), jnp.float32), ln1b=jnp.zeros((L, 1, D), jnp.float32),
        wq=nrm(keys[1], (L, D, D)), wk=nrm(keys[2], (L, D, D)), wv=nrm(keys[3], (L, D, D)),
        wp=nrm(keys[4], (L, D, D)), bp=jnp.zeros((L, 1, D), jnp.float32),
        ln2g=jnp.ones((L, 1, D), jnp.float32), ln2b=jnp.zeros((L, 1, D), jnp.float32),
        w1=nrm(keys[5], (L, D, F)), b1=jnp.zeros((L, 1, F), jnp.float32),
        w2=nrm(keys[6], (L, F, D)), b2=jnp.zeros((L, 1, D), jnp.float32),
        lnfg=jnp.ones((1, D), jnp.float32), lnfb=jnp.zeros((1, D), jnp.float32),
        wout=nrm(keys[7], (D, V)), bout=jnp.zeros((1, V), jnp.float32),
    )


def positional_encoding():
    position = jnp.arange(CONTEXT_LENGTH, dtype=jnp.float32)[:, None]
    div_term = jnp.exp(jnp.arange(0, D_MODEL, 2, dtype=jnp.float32)
                       * (-math.log(10000.0) / D_MODEL))
    pe = jnp.zeros((CONTEXT_LENGTH, D_MODEL), jnp.float32)
    pe = pe.at[:, 0::2].set(jnp.sin(position * div_term))
    pe = pe.at[:, 1::2].set(jnp.cos(position * div_term))
    return pe


def pack_params(params):
    """One-time host-side packing: per-head fused QKV (scale folded into Q),
    per-head out-projection, lane-padded LM head, bf16 matmul weights."""
    L, D, H, HS, V = NUM_BLOCKS, D_MODEL, NUM_HEADS, HEAD_SIZE, MAX_TOKEN_VALUE
    scale = 1.0 / math.sqrt(HS)

    def heads_of(w):                                   # (L, D, D) -> (L, H, D, HS)
        return w.reshape(L, D, H, HS).transpose(0, 2, 1, 3)

    wqkv = jnp.concatenate([heads_of(params['wq']) * scale,
                            heads_of(params['wk']),
                            heads_of(params['wv'])], axis=-1)      # (L, H, D, 3*HS)
    wp_heads = params['wp'].reshape(L, H, HS, D)                   # rows grouped by head
    wout_pad = jnp.zeros((D, VOCAB_PAD), jnp.float32).at[:, :V].set(params['wout'])
    bout_pad = jnp.zeros((1, VOCAB_PAD), jnp.float32).at[:, :V].set(params['bout'])
    return dict(
        embedding=params['embedding'],
        pos_enc=positional_encoding(),
        ln1g=params['ln1g'], ln1b=params['ln1b'],
        wqkv=wqkv.astype(jnp.bfloat16),
        wp=wp_heads.astype(jnp.bfloat16), bp=params['bp'],
        ln2g=params['ln2g'], ln2b=params['ln2b'],
        w1=params['w1'].astype(jnp.bfloat16), b1=params['b1'],
        w2=params['w2'].astype(jnp.bfloat16), b2=params['b2'],
        lnfg=params['lnfg'], lnfb=params['lnfb'],
        wout=wout_pad.astype(jnp.bfloat16), bout=bout_pad,
    )


@jax.jit
def transformer_language_model(idx, packed):
    B, T = idx.shape
    assert T <= CONTEXT_LENGTH and T % 8 == 0
    D, F, L, H, HS = D_MODEL, FFN_DIM, NUM_BLOCKS, NUM_HEADS, HEAD_SIZE

    # glue: embedding gather + sinusoidal positional encoding (plain JAX, jitted)
    tok_emb = packed['embedding'][idx]                                  # (B, T, D)
    x = (tok_emb + packed['pos_enc'][:T]).astype(jnp.float32).reshape(B * T, D)

    def per_layer(*dims):       # layer-streamed weight: leading layer dim squeezed
        return pl.BlockSpec((None,) + dims, lambda b, l, _n=len(dims): (l,) + (0,) * _n)

    def shared(*dims):          # layer-invariant weight: DMA'd once, never re-fetched
        return pl.BlockSpec(dims, lambda b, l, _n=len(dims): (0,) * _n)

    grid_spec = pltpu.PrefetchScalarGridSpec(
        num_scalar_prefetch=0,
        grid=(B, L),                                    # (parallel batch, arbitrary layer)
        in_specs=[
            pl.BlockSpec((T, D), lambda b, l: (b, 0)),  # x_emb rows of this batch element
            per_layer(1, D), per_layer(1, D),           # ln1 gamma / beta
            per_layer(H, D, 3 * HS),                    # fused per-head QKV (bf16)
            per_layer(H, HS, D),                        # per-head out-projection (bf16)
            per_layer(1, D),                            # projection bias
            per_layer(1, D), per_layer(1, D),           # ln2 gamma / beta
            per_layer(D, F), per_layer(1, F),           # ffn w1 / b1
            per_layer(F, D), per_layer(1, D),           # ffn w2 / b2
            shared(1, D), shared(1, D),                 # final LN gamma / beta
            shared(D, VOCAB_PAD), shared(1, VOCAB_PAD), # LM head (lane-padded)
        ],
        out_specs=pl.BlockSpec((T, VOCAB_PAD), lambda b, l: (b, 0)),
        scratch_shapes=[pltpu.VMEM((T, D), jnp.float32)],   # residual-stream carry
    )

    logits_flat = pl.pallas_call(
        transformer_kernel,
        out_shape=jax.ShapeDtypeStruct((B * T, VOCAB_PAD), jnp.float32),
        grid_spec=grid_spec,
        compiler_params=pltpu.CompilerParams(
            dimension_semantics=("parallel", "arbitrary")),
    )(x,
      packed['ln1g'], packed['ln1b'], packed['wqkv'], packed['wp'], packed['bp'],
      packed['ln2g'], packed['ln2b'], packed['w1'], packed['b1'],
      packed['w2'], packed['b2'],
      packed['lnfg'], packed['lnfb'], packed['wout'], packed['bout'])

    logits = logits_flat.reshape(B, T, VOCAB_PAD)[:, :, :MAX_TOKEN_VALUE]  # strip pad
    return logits, None   # loss is None when targets are not provided


if __name__ == "__main__":
    key = jax.random.PRNGKey(0)
    pkey, ikey = jax.random.split(key)
    params = init_params(pkey)
    packed = pack_params(params)                       # one-time weight packing
    idx = jax.random.randint(ikey, (2, CONTEXT_LENGTH), 0, MAX_TOKEN_VALUE + 1,
                             dtype=jnp.int32)
    logits, loss = transformer_language_model(idx, packed)
    jax.block_until_ready(logits)
    assert logits.shape == (2, CONTEXT_LENGTH, MAX_TOKEN_VALUE)
    assert bool(jnp.isfinite(logits).all())
    print("KERNEL_OK")
</pallas_src>

<mosaic_0001>
module attributes {stable_mosaic.version = 11 : i64} {
  func.func @transformer_kernel(%arg0: i32, %arg1: i32, %arg2: memref<16x64xf32, #tpu.memory_space<vmem>>, %arg3: memref<1x1x64xf32, #tpu.memory_space<vmem>>, %arg4: memref<1x1x64xf32, #tpu.memory_space<vmem>>, %arg5: memref<1x4x64x48xbf16, #tpu.memory_space<vmem>>, %arg6: memref<1x4x16x64xbf16, #tpu.memory_space<vmem>>, %arg7: memref<1x1x64xf32, #tpu.memory_space<vmem>>, %arg8: memref<1x1x64xf32, #tpu.memory_space<vmem>>, %arg9: memref<1x1x64xf32, #tpu.memory_space<vmem>>, %arg10: memref<1x64x256xbf16, #tpu.memory_space<vmem>>, %arg11: memref<1x1x256xf32, #tpu.memory_space<vmem>>, %arg12: memref<1x256x64xbf16, #tpu.memory_space<vmem>>, %arg13: memref<1x1x64xf32, #tpu.memory_space<vmem>>, %arg14: memref<1x64xf32, #tpu.memory_space<vmem>>, %arg15: memref<1x64xf32, #tpu.memory_space<vmem>>, %arg16: memref<64x128xbf16, #tpu.memory_space<vmem>>, %arg17: memref<1x128xf32, #tpu.memory_space<vmem>>, %arg18: memref<16x128xf32, #tpu.memory_space<vmem>>, %arg19: memref<16x64xf32, #tpu.memory_space<vmem>>) attributes {dimension_semantics = [#tpu.dimension_semantics<parallel>, #tpu.dimension_semantics<arbitrary>], iteration_bounds = array<i64: 2, 8>, scalar_prefetch = 0 : i64, scratch_operands = 1 : i64, tpu.core_type = #tpu.core_type<tc>, window_params = [{transform_indices = @transform_0, window_bounds = array<i64: 16, 64>}, {transform_indices = @transform_1, window_bounds = array<i64: 1, 1, 64>}, {transform_indices = @transform_2, window_bounds = array<i64: 1, 1, 64>}, {transform_indices = @transform_3, window_bounds = array<i64: 1, 4, 64, 48>}, {transform_indices = @transform_4, window_bounds = array<i64: 1, 4, 16, 64>}, {transform_indices = @transform_5, window_bounds = array<i64: 1, 1, 64>}, {transform_indices = @transform_6, window_bounds = array<i64: 1, 1, 64>}, {transform_indices = @transform_7, window_bounds = array<i64: 1, 1, 64>}, {transform_indices = @transform_8, window_bounds = array<i64: 1, 64, 256>}, {transform_indices = @transform_9, window_bounds = array<i64: 1, 1, 256>}, {transform_indices = @transform_10, window_bounds = array<i64: 1, 256, 64>}, {transform_indices = @transform_11, window_bounds = array<i64: 1, 1, 64>}, {pipeline_mode = #tpu.pipeline_mode<synchronous>, transform_indices = @transform_12, window_bounds = array<i64: 1, 64>}, {pipeline_mode = #tpu.pipeline_mode<synchronous>, transform_indices = @transform_13, window_bounds = array<i64: 1, 64>}, {pipeline_mode = #tpu.pipeline_mode<synchronous>, transform_indices = @transform_14, window_bounds = array<i64: 64, 128>}, {pipeline_mode = #tpu.pipeline_mode<synchronous>, transform_indices = @transform_15, window_bounds = array<i64: 1, 128>}, {transform_indices = @transform_16, window_bounds = array<i64: 16, 128>}]} {
    %c0_i32 = arith.constant 0 : i32
    %0 = arith.cmpi eq, %arg1, %c0_i32 : i32
    %1 = arith.extui %0 : i1 to i32
    %c0_i32_0 = arith.constant 0 : i32
    %2 = arith.cmpi ne, %1, %c0_i32_0 : i32
    scf.if %2 {
      %c0_61 = arith.constant 0 : index
      %c0_62 = arith.constant 0 : index
      %120 = vector.load %arg2[%c0_61, %c0_62] : memref<16x64xf32, #tpu.memory_space<vmem>>, vector<16x64xf32>
      %c0_63 = arith.constant 0 : index
      %c0_64 = arith.constant 0 : index
      %121 = vector.load %arg19[%c0_63, %c0_64] : memref<16x64xf32, #tpu.memory_space<vmem>>, vector<16x64xf32>
      tpu.vector_store %arg19[%c0_63, %c0_64], %120 {strides = array<i32>} : memref<16x64xf32, #tpu.memory_space<vmem>>, vector<16x64xf32>,
    } else {
    }
    %c0 = arith.constant 0 : index
    %c0_1 = arith.constant 0 : index
    %3 = vector.load %arg19[%c0, %c0_1] : memref<16x64xf32, #tpu.memory_space<vmem>>, vector<16x64xf32>
    %4 = tpu.iota {dimensions = array<i32: 0>} : vector<16x16xi32>
    %5 = tpu.iota {dimensions = array<i32: 1>} : vector<16x16xi32>
    %6 = arith.cmpi sle, %5, %4 : vector<16x16xi32>
    %cst = arith.constant 0.000000e+00 : f32
    %cst_2 = arith.constant -1.000000e+30 : f32
    %7 = vector.broadcast %cst : f32 to vector<16x16xf32>
    %8 = vector.broadcast %cst_2 : f32 to vector<16x16xf32>
    %9 = arith.select %6, %7, %8 : vector<16x16xi1>, vector<16x16xf32>
    %c0_3 = arith.constant 0 : index
    %c0_4 = arith.constant 0 : index
    %c0_5 = arith.constant 0 : index
    %10 = vector.load %arg3[%c0_3, %c0_4, %c0_5] : memref<1x1x64xf32, #tpu.memory_space<vmem>>, vector<1x1x64xf32>
    %11 = vector.shape_cast %10 : vector<1x1x64xf32> to vector<1x64xf32>
    %c0_6 = arith.constant 0 : index
    %c0_7 = arith.constant 0 : index
    %c0_8 = arith.constant 0 : index
    %12 = vector.load %arg4[%c0_6, %c0_7, %c0_8] : memref<1x1x64xf32, #tpu.memory_space<vmem>>, vector<1x1x64xf32>
    %13 = vector.shape_cast %12 : vector<1x1x64xf32> to vector<1x64xf32>
    %cst_9 = arith.constant dense<0.000000e+00> : vector<16xf32>
    %14 = vector.multi_reduction <add>, %3, %cst_9 [1] : vector<16x64xf32> to vector<16xf32>
    %15 = vector.shape_cast %14 : vector<16xf32> to vector<16x1xf32>
    %16 = arith.mulf %3, %3 : vector<16x64xf32>
    %cst_10 = arith.constant dense<0.000000e+00> : vector<16xf32>
    %17 = vector.multi_reduction <add>, %16, %cst_10 [1] : vector<16x64xf32> to vector<16xf32>
    %18 = vector.shape_cast %17 : vector<16xf32> to vector<16x1xf32>
    %cst_11 = arith.constant 1.562500e-02 : f32
    %19 = vector.broadcast %cst_11 : f32 to vector<16x1xf32>
    %20 = arith.mulf %15, %19 : vector<16x1xf32>
    %cst_12 = arith.constant 1.562500e-02 : f32
    %21 = vector.broadcast %cst_12 : f32 to vector<16x1xf32>
    %22 = arith.mulf %18, %21 : vector<16x1xf32>
    %23 = arith.mulf %20, %20 : vector<16x1xf32>
    %24 = arith.subf %22, %23 : vector<16x1xf32>
    %25 = vector.broadcast %20 : vector<16x1xf32> to vector<16x64xf32>
    %26 = arith.subf %3, %25 : vector<16x64xf32>
    %cst_13 = arith.constant 9.99999974E-6 : f32
    %27 = vector.broadcast %cst_13 : f32 to vector<16x1xf32>
    %28 = arith.addf %24, %27 : vector<16x1xf32>
    %29 = math.rsqrt %28 : vector<16x1xf32>
    %30 = vector.broadcast %29 : vector<16x1xf32> to vector<16x64xf32>
    %31 = arith.mulf %26, %30 : vector<16x64xf32>
    %32 = vector.broadcast %11 : vector<1x64xf32> to vector<16x64xf32>
    %33 = arith.mulf %31, %32 : vector<16x64xf32>
    %34 = vector.broadcast %13 : vector<1x64xf32> to vector<16x64xf32>
    %35 = arith.addf %33, %34 : vector<16x64xf32>
    %36 = arith.truncf %35 : vector<16x64xf32> to vector<16x64xbf16>
    %37 = vector.shape_cast %36 : vector<16x64xbf16> to vector<1x16x64xbf16>
    %38 = vector.shape_cast %37 : vector<1x16x64xbf16> to vector<1x16x64xbf16>
    %39 = vector.broadcast %38 : vector<1x16x64xbf16> to vector<4x16x64xbf16>
    %c0_14 = arith.constant 0 : index
    %c0_15 = arith.constant 0 : index
    %c0_16 = arith.constant 0 : index
    %c0_17 = arith.constant 0 : index
    %40 = vector.load %arg5[%c0_14, %c0_15, %c0_16, %c0_17] : memref<1x4x64x48xbf16, #tpu.memory_space<vmem>>, vector<1x4x64x48xbf16>
    %41 = vector.shape_cast %40 : vector<1x4x64x48xbf16> to vector<4x64x48xbf16>
    "tpu.trace_start"() <{level = 10 : i32, message = "htd,hdo->hto"}> : () -> ()
    %cst_18 = arith.constant dense<0.000000e+00> : vector<4x16x48xf32>
    %42 = tpu.matmul %39, %41, %cst_18 {dimension_numbers = #tpu.dot_dimension_numbers<[2], [1], [1], [2], [0, 0, 0, 1, 1, 2], [0], [0]>} : vector<4x16x64xbf16>, vector<4x64x48xbf16>, vector<4x16x48xf32> -> vector<4x16x48xf32>
    "tpu.trace_stop"() : () -> ()
    %43 = vector.extract_strided_slice %42 {offsets = [0, 0, 0], sizes = [4, 16, 16], strides = [1, 1, 1]} : vector<4x16x48xf32> to vector<4x16x16xf32>
    %44 = vector.extract_strided_slice %42 {offsets = [0, 0, 16], sizes = [4, 16, 16], strides = [1, 1, 1]} : vector<4x16x48xf32> to vector<4x16x16xf32>
    %45 = vector.extract_strided_slice %42 {offsets = [0, 0, 32], sizes = [4, 16, 16], strides = [1, 1, 1]} : vector<4x16x48xf32> to vector<4x16x16xf32>
    "tpu.trace_start"() <{level = 10 : i32, message = "hte,hse->hts"}> : () -> ()
    %cst_19 = arith.constant dense<0.000000e+00> : vector<4x16x16xf32>
    %46 = tpu.matmul %43, %44, %cst_19 {dimension_numbers = #tpu.dot_dimension_numbers<[2], [2], [1], [1], [0, 0, 0, 1, 1, 1], [0], [0]>} : vector<4x16x16xf32>, vector<4x16x16xf32>, vector<4x16x16xf32> -> vector<4x16x16xf32>
    "tpu.trace_stop"() : () -> ()
    %47 = vector.shape_cast %9 : vector<16x16xf32> to vector<1x16x16xf32>
    %48 = vector.broadcast %47 : vector<1x16x16xf32> to vector<4x16x16xf32>
    %49 = arith.addf %46, %48 : vector<4x16x16xf32>
    %cst_20 = arith.constant dense<0xFF800000> : vector<4x16xf32>
    %50 = vector.multi_reduction <maximumf>, %49, %cst_20 [2] : vector<4x16x16xf32> to vector<4x16xf32>
    %51 = vector.shape_cast %50 : vector<4x16xf32> to vector<4x16x1xf32>
    %52 = vector.broadcast %51 : vector<4x16x1xf32> to vector<4x16x16xf32>
    %53 = arith.subf %49, %52 : vector<4x16x16xf32>
    %54 = math.exp %53 : vector<4x16x16xf32>
    %cst_21 = arith.constant dense<0.000000e+00> : vector<4x16xf32>
    %55 = vector.multi_reduction <add>, %54, %cst_21 [2] : vector<4x16x16xf32> to vector<4x16xf32>
    %56 = vector.shape_cast %55 : vector<4x16xf32> to vector<4x16x1xf32>
    %57 = tpu.reciprocal %56 : vector<4x16x1xf32> -> vector<4x16x1xf32>
    %58 = vector.broadcast %57 : vector<4x16x1xf32> to vector<4x16x16xf32>
    %59 = arith.mulf %54, %58 : vector<4x16x16xf32>
    "tpu.trace_start"() <{level = 10 : i32, message = "hts,hse->hte"}> : () -> ()
    %cst_22 = arith.constant dense<0.000000e+00> : vector<4x16x16xf32>
    %60 = tpu.matmul %59, %45, %cst_22 {dimension_numbers = #tpu.dot_dimension_numbers<[2], [1], [1], [2], [0, 0, 0, 1, 1, 2], [0], [0]>} : vector<4x16x16xf32>, vector<4x16x16xf32>, vector<4x16x16xf32> -> vector<4x16x16xf32>
    "tpu.trace_stop"() : () -> ()
    %61 = arith.truncf %60 : vector<4x16x16xf32> to vector<4x16x16xbf16>
    %c0_23 = arith.constant 0 : index
    %c0_24 = arith.constant 0 : index
    %c0_25 = arith.constant 0 : index
    %c0_26 = arith.constant 0 : index
    %62 = vector.load %arg6[%c0_23, %c0_24, %c0_25, %c0_26] : memref<1x4x16x64xbf16, #tpu.memory_space<vmem>>, vector<1x4x16x64xbf16>
    %63 = vector.shape_cast %62 : vector<1x4x16x64xbf16> to vector<4x16x64xbf16>
    "tpu.trace_start"() <{level = 10 : i32, message = "hte,hek->htk"}> : () -> ()
    %cst_27 = arith.constant dense<0.000000e+00> : vector<4x16x64xf32>
    %64 = tpu.matmul %61, %63, %cst_27 {dimension_numbers = #tpu.dot_dimension_numbers<[2], [1], [1], [2], [0, 0, 0, 1, 1, 2], [0], [0]>} : vector<4x16x16xbf16>, vector<4x16x64xbf16>, vector<4x16x64xf32> -> vector<4x16x64xf32>
    "tpu.trace_stop"() : () -> ()
    %cst_28 = arith.constant dense<0.000000e+00> : vector<16x64xf32>
    %65 = vector.multi_reduction <add>, %64, %cst_28 [0] : vector<4x16x64xf32> to vector<16x64xf32>
    %66 = arith.addf %3, %65 : vector<16x64xf32>
    %c0_29 = arith.constant 0 : index
    %c0_30 = arith.constant 0 : index
    %c0_31 = arith.constant 0 : index
    %67 = vector.load %arg7[%c0_29, %c0_30, %c0_31] : memref<1x1x64xf32, #tpu.memory_space<vmem>>, vector<1x1x64xf32>
    %68 = vector.shape_cast %67 : vector<1x1x64xf32> to vector<1x64xf32>
    %69 = vector.broadcast %68 : vector<1x64xf32> to vector<16x64xf32>
    %70 = arith.addf %66, %69 : vector<16x64xf32>
    %c0_32 = arith.constant 0 : index
    %c0_33 = arith.constant 0 : index
    %c0_34 = arith.constant 0 : index
    %71 = vector.load %arg8[%c0_32, %c0_33, %c0_34] : memref<1x1x64xf32, #tpu.memory_space<vmem>>, vector<1x1x64xf32>
    %72 = vector.shape_cast %71 : vector<1x1x64xf32> to vector<1x64xf32>
    %c0_35 = arith.constant 0 : index
    %c0_36 = arith.constant 0 : index
    %c0_37 = arith.constant 0 : index
    %73 = vector.load %arg9[%c0_35, %c0_36, %c0_37] : memref<1x1x64xf32, #tpu.memory_space<vmem>>, vector<1x1x64xf32>
    %74 = vector.shape_cast %73 : vector<1x1x64xf32> to vector<1x64xf32>
    %cst_38 = arith.constant dense<0.000000e+00> : vector<16xf32>
    %75 = vector.multi_reduction <add>, %70, %cst_38 [1] : vector<16x64xf32> to vector<16xf32>
    %76 = vector.shape_cast %75 : vector<16xf32> to vector<16x1xf32>
    %77 = arith.mulf %70, %70 : vector<16x64xf32>
    %cst_39 = arith.constant dense<0.000000e+00> : vector<16xf32>
    %78 = vector.multi_reduction <add>, %77, %cst_39 [1] : vector<16x64xf32> to vector<16xf32>
    %79 = vector.shape_cast %78 : vector<16xf32> to vector<16x1xf32>
    %cst_40 = arith.constant 1.562500e-02 : f32
    %80 = vector.broadcast %cst_40 : f32 to vector<16x1xf32>
    %81 = arith.mulf %76, %80 : vector<16x1xf32>
    %cst_41 = arith.constant 1.562500e-02 : f32
    %82 = vector.broadcast %cst_41 : f32 to vector<16x1xf32>
    %83 = arith.mulf %79, %82 : vector<16x1xf32>
    %84 = arith.mulf %81, %81 : vector<16x1xf32>
    %85 = arith.subf %83, %84 : vector<16x1xf32>
    %86 = vector.broadcast %81 : vector<16x1xf32> to vector<16x64xf32>
    %87 = arith.subf %70, %86 : vector<16x64xf32>
    %cst_42 = arith.constant 9.99999974E-6 : f32
    %88 = vector.broadcast %cst_42 : f32 to vector<16x1xf32>
    %89 = arith.addf %85, %88 : vector<16x1xf32>
    %90 = math.rsqrt %89 : vector<16x1xf32>
    %91 = vector.broadcast %90 : vector<16x1xf32> to vector<16x64xf32>
    %92 = arith.mulf %87, %91 : vector<16x64xf32>
    %93 = vector.broadcast %72 : vector<1x64xf32> to vector<16x64xf32>
    %94 = arith.mulf %92, %93 : vector<16x64xf32>
    %95 = vector.broadcast %74 : vector<1x64xf32> to vector<16x64xf32>
    %96 = arith.addf %94, %95 : vector<16x64xf32>
    %97 = arith.truncf %96 : vector<16x64xf32> to vector<16x64xbf16>
    %c0_43 = arith.constant 0 : index
    %c0_44 = arith.constant 0 : index
    %c0_45 = arith.constant 0 : index
    %98 = vector.load %arg10[%c0_43, %c0_44, %c0_45] : memref<1x64x256xbf16, #tpu.memory_space<vmem>>, vector<1x64x256xbf16>
    %99 = vector.shape_cast %98 : vector<1x64x256xbf16> to vector<64x256xbf16>
    %cst_46 = arith.constant dense<0.000000e+00> : vector<16x256xf32>
    %100 = tpu.matmul %97, %99, %cst_46 {dimension_numbers = #tpu.dot_dimension_numbers<[1], [0], [0], [1], [0, 0, 1, 1], [], []>} : vector<16x64xbf16>, vector<64x256xbf16>, vector<16x256xf32> -> vector<16x256xf32>
    %c0_47 = arith.constant 0 : index
    %c0_48 = arith.constant 0 : index
    %c0_49 = arith.constant 0 : index
    %101 = vector.load %arg11[%c0_47, %c0_48, %c0_49] : memref<1x1x256xf32, #tpu.memory_space<vmem>>, vector<1x1x256xf32>
    %102 = vector.shape_cast %101 : vector<1x1x256xf32> to vector<1x256xf32>
    %103 = vector.broadcast %102 : vector<1x256xf32> to vector<16x256xf32>
    %104 = arith.addf %100, %103 : vector<16x256xf32>
    %cst_50 = arith.constant 0.000000e+00 : f32
    %105 = vector.broadcast %cst_50 : f32 to vector<16x256xf32>
    %106 = arith.maximumf %104, %105 : vector<16x256xf32>
    %107 = arith.truncf %106 : vector<16x256xf32> to vector<16x256xbf16>
    %c0_51 = arith.constant 0 : index
    %c0_52 = arith.constant 0 : index
    %c0_53 = arith.constant 0 : index
    %108 = vector.load %arg12[%c0_51, %c0_52, %c0_53] : memref<1x256x64xbf16, #tpu.memory_space<vmem>>, vector<1x256x64xbf16>
    %109 = vector.shape_cast %108 : vector<1x256x64xbf16> to vector<256x64xbf16>
    %cst_54 = arith.constant dense<0.000000e+00> : vector<16x64xf32>
    %110 = tpu.matmul %107, %109, %cst_54 {dimension_numbers = #tpu.dot_dimension_numbers<[1], [0], [0], [1], [0, 0, 1, 1], [], []>} : vector<16x256xbf16>, vector<256x64xbf16>, vector<16x64xf32> -> vector<16x64xf32>
    %c0_55 = arith.constant 0 : index
    %c0_56 = arith.constant 0 : index
    %c0_57 = arith.constant 0 : index
    %111 = vector.load %arg13[%c0_55, %c0_56, %c0_57] : memref<1x1x64xf32, #tpu.memory_space<vmem>>, vector<1x1x64xf32>
    %112 = vector.shape_cast %111 : vector<1x1x64xf32> to vector<1x64xf32>
    %113 = vector.broadcast %112 : vector<1x64xf32> to vector<16x64xf32>
    %114 = arith.addf %110, %113 : vector<16x64xf32>
    %115 = arith.addf %70, %114 : vector<16x64xf32>
    %c0_58 = arith.constant 0 : index
    %c0_59 = arith.constant 0 : index
    %116 = vector.load %arg19[%c0_58, %c0_59] : memref<16x64xf32, #tpu.memory_space<vmem>>, vector<16x64xf32>
    tpu.vector_store %arg19[%c0_58, %c0_59], %115 {strides = array<i32>} : memref<16x64xf32, #tpu.memory_space<vmem>>, vector<16x64xf32>,
    %c7_i32 = arith.constant 7 : i32
    %117 = arith.cmpi eq, %arg1, %c7_i32 : i32
    %118 = arith.extui %117 : i1 to i32
    %c0_i32_60 = arith.constant 0 : i32
    %119 = arith.cmpi ne, %118, %c0_i32_60 : i32
    scf.if %119 {
      %c0_61 = arith.constant 0 : index
      %c0_62 = arith.constant 0 : index
      %120 = vector.load %arg14[%c0_61, %c0_62] : memref<1x64xf32, #tpu.memory_space<vmem>>, vector<1x64xf32>
      %c0_63 = arith.constant 0 : index
      %c0_64 = arith.constant 0 : index
      %121 = vector.load %arg15[%c0_63, %c0_64] : memref<1x64xf32, #tpu.memory_space<vmem>>, vector<1x64xf32>
      %cst_65 = arith.constant dense<0.000000e+00> : vector<16xf32>
      %122 = vector.multi_reduction <add>, %115, %cst_65 [1] : vector<16x64xf32> to vector<16xf32>
      %123 = vector.shape_cast %122 : vector<16xf32> to vector<16x1xf32>
      %124 = arith.mulf %115, %115 : vector<16x64xf32>
      %cst_66 = arith.constant dense<0.000000e+00> : vector<16xf32>
      %125 = vector.multi_reduction <add>, %124, %cst_66 [1] : vector<16x64xf32> to vector<16xf32>
      %126 = vector.shape_cast %125 : vector<16xf32> to vector<16x1xf32>
      %cst_67 = arith.constant 1.562500e-02 : f32
      %127 = vector.broadcast %cst_67 : f32 to vector<16x1xf32>
      %128 = arith.mulf %123, %127 : vector<16x1xf32>
      %cst_68 = arith.constant 1.562500e-02 : f32
      %129 = vector.broadcast %cst_68 : f32 to vector<16x1xf32>
      %130 = arith.mulf %126, %129 : vector<16x1xf32>
      %131 = arith.mulf %128, %128 : vector<16x1xf32>
      %132 = arith.subf %130, %131 : vector<16x1xf32>
      %133 = vector.broadcast %128 : vector<16x1xf32> to vector<16x64xf32>
      %134 = arith.subf %115, %133 : vector<16x64xf32>
      %cst_69 = arith.constant 9.99999974E-6 : f32
      %135 = vector.broadcast %cst_69 : f32 to vector<16x1xf32>
      %136 = arith.addf %132, %135 : vector<16x1xf32>
      %137 = math.rsqrt %136 : vector<16x1xf32>
      %138 = vector.broadcast %137 : vector<16x1xf32> to vector<16x64xf32>
      %139 = arith.mulf %134, %138 : vector<16x64xf32>
      %140 = vector.broadcast %120 : vector<1x64xf32> to vector<16x64xf32>
      %141 = arith.mulf %139, %140 : vector<16x64xf32>
      %142 = vector.broadcast %121 : vector<1x64xf32> to vector<16x64xf32>
      %143 = arith.addf %141, %142 : vector<16x64xf32>
      %144 = arith.truncf %143 : vector<16x64xf32> to vector<16x64xbf16>
      %c0_70 = arith.constant 0 : index
      %c0_71 = arith.constant 0 : index
      %145 = vector.load %arg16[%c0_70, %c0_71] : memref<64x128xbf16, #tpu.memory_space<vmem>>, vector<64x128xbf16>
      %cst_72 = arith.constant dense<0.000000e+00> : vector<16x128xf32>
      %146 = tpu.matmul %144, %145, %cst_72 {dimension_numbers = #tpu.dot_dimension_numbers<[1], [0], [0], [1], [0, 0, 1, 1], [], []>} : vector<16x64xbf16>, vector<64x128xbf16>, vector<16x128xf32> -> vector<16x128xf32>
      %c0_73 = arith.constant 0 : index
      %c0_74 = arith.constant 0 : index
      %147 = vector.load %arg17[%c0_73, %c0_74] : memref<1x128xf32, #tpu.memory_space<vmem>>, vector<1x128xf32>
      %148 = vector.broadcast %147 : vector<1x128xf32> to vector<16x128xf32>
      %149 = arith.addf %146, %148 : vector<16x128xf32>
      %c0_75 = arith.constant 0 : index
      %c0_76 = arith.constant 0 : index
      %150 = vector.load %arg18[%c0_75, %c0_76] : memref<16x128xf32, #tpu.memory_space<vmem>>, vector<16x128xf32>
      tpu.vector_store %arg18[%c0_75, %c0_76], %149 {strides = array<i32>} : memref<16x128xf32, #tpu.memory_space<vmem>>, vector<16x128xf32>,
    } else {
    }
    return
  }
  func.func @transform_0(%arg0: i32, %arg1: i32) -> (i32, i32) {
    %c0_i32 = arith.constant 0 : i32
    %c0_i32_0 = arith.constant 0 : i32
    return %arg0, %c0_i32 : i32, i32
  }
  func.func @transform_1(%arg0: i32, %arg1: i32) -> (i32, i32, i32) {
    %c0_i32 = arith.constant 0 : i32
    %c0_i32_0 = arith.constant 0 : i32
    %c0_i32_1 = arith.constant 0 : i32
    return %arg1, %c0_i32, %c0_i32_0 : i32, i32, i32
  }
  func.func @transform_2(%arg0: i32, %arg1: i32) -> (i32, i32, i32) {
    %c0_i32 = arith.constant 0 : i32
    %c0_i32_0 = arith.constant 0 : i32
    %c0_i32_1 = arith.constant 0 : i32
    return %arg1, %c0_i32, %c0_i32_0 : i32, i32, i32
  }
  func.func @transform_3(%arg0: i32, %arg1: i32) -> (i32, i32, i32, i32) {
    %c0_i32 = arith.constant 0 : i32
    %c0_i32_0 = arith.constant 0 : i32
    %c0_i32_1 = arith.constant 0 : i32
    %c0_i32_2 = arith.constant 0 : i32
    return %arg1, %c0_i32, %c0_i32_0, %c0_i32_1 : i32, i32, i32, i32
  }
  func.func @transform_4(%arg0: i32, %arg1: i32) -> (i32, i32, i32, i32) {
    %c0_i32 = arith.constant 0 : i32
    %c0_i32_0 = arith.constant 0 : i32
    %c0_i32_1 = arith.constant 0 : i32
    %c0_i32_2 = arith.constant 0 : i32
    return %arg1, %c0_i32, %c0_i32_0, %c0_i32_1 : i32, i32, i32, i32
  }
  func.func @transform_5(%arg0: i32, %arg1: i32) -> (i32, i32, i32) {
    %c0_i32 = arith.constant 0 : i32
    %c0_i32_0 = arith.constant 0 : i32
    %c0_i32_1 = arith.constant 0 : i32
    return %arg1, %c0_i32, %c0_i32_0 : i32, i32, i32
  }
  func.func @transform_6(%arg0: i32, %arg1: i32) -> (i32, i32, i32) {
    %c0_i32 = arith.constant 0 : i32
    %c0_i32_0 = arith.constant 0 : i32
    %c0_i32_1 = arith.constant 0 : i32
    return %arg1, %c0_i32, %c0_i32_0 : i32, i32, i32
  }
  func.func @transform_7(%arg0: i32, %arg1: i32) -> (i32, i32, i32) {
    %c0_i32 = arith.constant 0 : i32
    %c0_i32_0 = arith.constant 0 : i32
    %c0_i32_1 = arith.constant 0 : i32
    return %arg1, %c0_i32, %c0_i32_0 : i32, i32, i32
  }
  func.func @transform_8(%arg0: i32, %arg1: i32) -> (i32, i32, i32) {
    %c0_i32 = arith.constant 0 : i32
    %c0_i32_0 = arith.constant 0 : i32
    %c0_i32_1 = arith.constant 0 : i32
    return %arg1, %c0_i32, %c0_i32_0 : i32, i32, i32
  }
  func.func @transform_9(%arg0: i32, %arg1: i32) -> (i32, i32, i32) {
    %c0_i32 = arith.constant 0 : i32
    %c0_i32_0 = arith.constant 0 : i32
    %c0_i32_1 = arith.constant 0 : i32
    return %arg1, %c0_i32, %c0_i32_0 : i32, i32, i32
  }
  func.func @transform_10(%arg0: i32, %arg1: i32) -> (i32, i32, i32) {
    %c0_i32 = arith.constant 0 : i32
    %c0_i32_0 = arith.constant 0 : i32
    %c0_i32_1 = arith.constant 0 : i32
    return %arg1, %c0_i32, %c0_i32_0 : i32, i32, i32
  }
  func.func @transform_11(%arg0: i32, %arg1: i32) -> (i32, i32, i32) {
    %c0_i32 = arith.constant 0 : i32
    %c0_i32_0 = arith.constant 0 : i32
    %c0_i32_1 = arith.constant 0 : i32
    return %arg1, %c0_i32, %c0_i32_0 : i32, i32, i32
  }
  func.func @transform_12(%arg0: i32, %arg1: i32) -> (i32, i32) {
    %c0_i32 = arith.constant 0 : i32
    %c0_i32_0 = arith.constant 0 : i32
    %c0_i32_1 = arith.constant 0 : i32
    return %c0_i32, %c0_i32_0 : i32, i32
  }
  func.func @transform_13(%arg0: i32, %arg1: i32) -> (i32, i32) {
    %c0_i32 = arith.constant 0 : i32
    %c0_i32_0 = arith.constant 0 : i32
    %c0_i32_1 = arith.constant 0 : i32
    return %c0_i32, %c0_i32_0 : i32, i32
  }
  func.func @transform_14(%arg0: i32, %arg1: i32) -> (i32, i32) {
    %c0_i32 = arith.constant 0 : i32
    %c0_i32_0 = arith.constant 0 : i32
    %c0_i32_1 = arith.constant 0 : i32
    return %c0_i32, %c0_i32_0 : i32, i32
  }
  func.func @transform_15(%arg0: i32, %arg1: i32) -> (i32, i32) {
    %c0_i32 = arith.constant 0 : i32
    %c0_i32_0 = arith.constant 0 : i32
    %c0_i32_1 = arith.constant 0 : i32
    return %c0_i32, %c0_i32_0 : i32, i32
  }
  func.func @transform_16(%arg0: i32, %arg1: i32) -> (i32, i32) {
    %c0_i32 = arith.constant 0 : i32
    %c0_i32_0 = arith.constant 0 : i32
    return %arg0, %c0_i32 : i32, i32
  }
}

</mosaic_0001>

<llo_original>
// kernel: transformer_language_model.1
$region0: #{transformer_language_model.1}
  #allocation0 [shape = 'u32[]', space=smem, size = 0x4, offset = 0x4, fixed_abs, tag = 'smem constant byte address 0x4 - core index']
  #allocation1 [shape = 'u32[72,128]{1,0:T(1,128)}', space=vmem, size = 0x9000, scoped, tag = 'internal scratch']
  #allocation2 [shape = 'f32[16,64]{1,0:T(8,128)}', space=vmem, size = 0x2000, scoped, tag = 'scratch operand']
  %s0 = inlined_call_operand.vmem [shape: f32[32,64], index: 0, kind: input, shape index: {}]
  %s1 = inlined_call_operand.vmem [shape: f32[8,1,64], index: 1, kind: input, shape index: {}]
  %s2 = inlined_call_operand.vmem [shape: f32[8,1,64], index: 2, kind: input, shape index: {}]
  %s3 = inlined_call_operand.vmem [shape: bf16[8,4,64,48], index: 3, kind: input, shape index: {}]
  %s4 = inlined_call_operand.vmem [shape: bf16[8,4,16,64], index: 4, kind: input, shape index: {}]
  %s5 = inlined_call_operand.vmem [shape: f32[8,1,64], index: 5, kind: input, shape index: {}]
  %s6 = inlined_call_operand.vmem [shape: f32[8,1,64], index: 6, kind: input, shape index: {}]
  %s7 = inlined_call_operand.vmem [shape: f32[8,1,64], index: 7, kind: input, shape index: {}]
  %s8 = inlined_call_operand.vmem [shape: bf16[8,64,256], index: 8, kind: input, shape index: {}]
  %s9 = inlined_call_operand.vmem [shape: f32[8,1,256], index: 9, kind: input, shape index: {}]
  %s10 = inlined_call_operand.vmem [shape: bf16[8,256,64], index: 10, kind: input, shape index: {}]
  %s11 = inlined_call_operand.vmem [shape: f32[8,1,64], index: 11, kind: input, shape index: {}]
  %s12 = inlined_call_operand.vmem [shape: f32[1,64], index: 12, kind: input, shape index: {}]
  %s13 = inlined_call_operand.vmem [shape: f32[1,64], index: 13, kind: input, shape index: {}]
  %s14 = inlined_call_operand.vmem [shape: bf16[64,128], index: 14, kind: input, shape index: {}]
  %s15 = inlined_call_operand.vmem [shape: f32[1,128], index: 15, kind: input, shape index: {}]
  %s16 = inlined_call_operand.hbm [shape: f32[32,128], index: 16, kind: output, shape index: {}]
  %s17 = sld [smem:[#allocation0]]
  $region105: #{transformer_language_model.1} parent=0
    _
  %s19 = ssub.s32 1, %s17
  %s20 = scalar_select 0, %s19, %s17
  $region1: #{transformer_language_model.1} parent=0
    #allocation3 [shape = 'u8[16384]{0}', space=vmem, size = 0x4000, scoped, tag = 'output window, operand 0']
    #allocation4 [shape = 's32[2]{0}', space=sflag, size = 0x8, scoped, tag = 'scoped memory for transformer_language_model.1']
    %21 = vsyncpa [#allocation4], 0
    %s22 = scalar_lea.sflag [#allocation4], 1
    %23 = vsyncpa %s22, 0
    loop: start=0, step=1, limit=18
    $region2: #{transformer_language_model.1} parent=1 // loop_pre_header
      _
    $region3: #{transformer_language_model.1} parent=1 // loop_header
      %s25 = sphi 0, %s29
      %p26 = scmp.ge.s32.totalorder %s25, 18
      %s32 = sphi 0, %s44
      %s33 = sphi 0, %s40
      %s34 = sphi 0, %s32
      %s35 = sphi 0, %s33
      %s36 = sphi 0, %s34
      %s37 = sphi 0, %s35
      %s47 = sphi 0, %s49
      %s50 = sphi 0, %s47
      %s51 = sphi 0, %s50
      %s67 = sphi 0, %s51
      %s73 = sphi 0, %s75
      %s76 = sphi 0, %s73
      %s77 = sphi 0, %s76
      %s93 = sphi 0, %s77
      %s99 = sphi 0, %s101
      %s102 = sphi 0, %s99
      %s103 = sphi 0, %s102
      %s119 = sphi 0, %s103
      %s125 = sphi 0, %s127
      %s128 = sphi 0, %s125
      %s129 = sphi 0, %s128
      %s145 = sphi 0, %s129
      %s151 = sphi 0, %s153
      %s154 = sphi 0, %s151
      %s155 = sphi 0, %s154
      %s171 = sphi 0, %s155
      %s177 = sphi 0, %s179
      %s180 = sphi 0, %s177
      %s181 = sphi 0, %s180
      %s197 = sphi 0, %s181
      %s203 = sphi 0, %s205
      %s206 = sphi 0, %s203
      %s207 = sphi 0, %s206
      %s223 = sphi 0, %s207
      %s229 = sphi 0, %s231
      %s232 = sphi 0, %s229
      %s233 = sphi 0, %s232
      %s249 = sphi 0, %s233
      %s255 = sphi 0, %s257
      %s258 = sphi 0, %s255
      %s259 = sphi 0, %s258
      %s275 = sphi 0, %s259
      %s281 = sphi 0, %s283
      %s284 = sphi 0, %s281
      %s285 = sphi 0, %s284
      %s301 = sphi 0, %s285
      %s307 = sphi 0, %s309
      %s310 = sphi 0, %s307
      %s311 = sphi 0, %s310
      %s327 = sphi 0, %s311
      %s333 = sphi 0, %s335
      %s336 = sphi 0, %s333
      %s337 = sphi 0, %s336
      %s353 = sphi 0, %s337
      %s357 = sphi 0, %s357
      %s359 = sphi 0, %s357
      %s360 = sphi 0, %s359
      %s374 = sphi 0, %s360
      %s378 = sphi 0, %s378
      %s380 = sphi 0, %s378
      %s381 = sphi 0, %s380
      %s395 = sphi 0, %s381
      %s399 = sphi 0, %s399
      %s401 = sphi 0, %s399
      %s402 = sphi 0, %s401
      %s416 = sphi 0, %s402
      %s420 = sphi 0, %s420
      %s422 = sphi 0, %s420
      %s423 = sphi 0, %s422
      %s437 = sphi 0, %s423
      %s443 = sphi 0, %s445
      %s446 = sphi 0, %s443
      %s447 = sphi 0, %s446
      %s463 = sphi 0, %s447
    $region4: #{transformer_language_model.1} parent=1 // loop_header_branch
      %28 = sbr.rel (%p26) target = $region8
    $region5: #{transformer_language_model.1} parent=1 // loop_body
      %s30 = ssub.s32 %s25, 1
      %s31 = ssub.s32 %s25, 2
      %s38 = sadd.s32 1, %s33
      %p39 = scmp.ge.s32.totalorder %s38, 8
      %s40 = scalar_select %p39, 0, %s38
      %s41 = sadd.s32 1, %s32
      %s42 = scalar_select %p39, %s41, %s32
      %p43 = scmp.ge.s32.totalorder %s42, 2
      %s44 = scalar_select %p43, 0, %s42
      %s45 = ssub.s32 %s32, %s44
      %p46 = scmp.eq.s32.totalorder %s45, 0
      %s48 = sadd.s32 %s47, 1
      %s49 = scalar_select %p46, %s47, %s48
      %p52 = pneg %p46
      %p53 = scmp.eq.s32.totalorder %s25, 15
      %p54 = por %p52, %p53
      %p55 = scmp.ne.s32.totalorder %s47, %s50
      %p56 = scmp.eq.s32.totalorder %s25, 0
      %p57 = por %p55, %p56
      %p58 = scmp.ne.s32.totalorder %s47, %s50
      %p59 = scmp.eq.s32.totalorder %s30, 15
      %p60 = por %p58, %p59
      %p61 = scmp.ne.s32.totalorder %s50, %s51
      %p62 = scmp.eq.s32.totalorder %s30, 0
      %p63 = por %p61, %p62
      %p64 = scmp.ne.s32.totalorder %s50, %s51
      %p65 = scmp.eq.s32.totalorder %s31, 15
      %p66 = por %p64, %p65
      %p68 = scmp.ne.s32.totalorder %s51, %s67
      %p69 = scmp.eq.s32.totalorder %s31, 0
      %p70 = por %p68, %p69
      %s71 = ssub.s32 %s33, %s40
      %p72 = scmp.eq.s32.totalorder %s71, 0
      %s74 = sadd.s32 %s73, 1
      %s75 = scalar_select %p72, %s73, %s74
      %p78 = pneg %p72
      %p79 = scmp.eq.s32.totalorder %s25, 15
      %p80 = por %p78, %p79
      %p81 = scmp.ne.s32.totalorder %s73, %s76
      %p82 = scmp.eq.s32.totalorder %s25, 0
      %p83 = por %p81, %p82
      %p84 = scmp.ne.s32.totalorder %s73, %s76
      %p85 = scmp.eq.s32.totalorder %s30, 15
      %p86 = por %p84, %p85
      %p87 = scmp.ne.s32.totalorder %s76, %s77
      %p88 = scmp.eq.s32.totalorder %s30, 0
      %p89 = por %p87, %p88
      %p90 = scmp.ne.s32.totalorder %s76, %s77
      %p91 = scmp.eq.s32.totalorder %s31, 15
      %p92 = por %p90, %p91
      %p94 = scmp.ne.s32.totalorder %s77, %s93
      %p95 = scmp.eq.s32.totalorder %s31, 0
      %p96 = por %p94, %p95
      %s97 = ssub.s32 %s33, %s40
      %p98 = scmp.eq.s32.totalorder %s97, 0
      %s100 = sadd.s32 %s99, 1
      %s101 = scalar_select %p98, %s99, %s100
      %p104 = pneg %p98
      %p105 = scmp.eq.s32.totalorder %s25, 15
      %p106 = por %p104, %p105
      %p107 = scmp.ne.s32.totalorder %s99, %s102
      %p108 = scmp.eq.s32.totalorder %s25, 0
      %p109 = por %p107, %p108
      %p110 = scmp.ne.s32.totalorder %s99, %s102
      %p111 = scmp.eq.s32.totalorder %s30, 15
      %p112 = por %p110, %p111
      %p113 = scmp.ne.s32.totalorder %s102, %s103
      %p114 = scmp.eq.s32.totalorder %s30, 0
      %p115 = por %p113, %p114
      %p116 = scmp.ne.s32.totalorder %s102, %s103
      %p117 = scmp.eq.s32.totalorder %s31, 15
      %p118 = por %p116, %p117
      %p120 = scmp.ne.s32.totalorder %s103, %s119
      %p121 = scmp.eq.s32.totalorder %s31, 0
      %p122 = por %p120, %p121
      %s123 = ssub.s32 %s33, %s40
      %p124 = scmp.eq.s32.totalorder %s123, 0
      %s126 = sadd.s32 %s125, 1
      %s127 = scalar_select %p124, %s125, %s126
      %p130 = pneg %p124
      %p131 = scmp.eq.s32.totalorder %s25, 15
      %p132 = por %p130, %p131
      %p133 = scmp.ne.s32.totalorder %s125, %s128
      %p134 = scmp.eq.s32.totalorder %s25, 0
      %p135 = por %p133, %p134
      %p136 = scmp.ne.s32.totalorder %s125, %s128
      %p137 = scmp.eq.s32.totalorder %s30, 15
      %p138 = por %p136, %p137
      %p139 = scmp.ne.s32.totalorder %s128, %s129
      %p140 = scmp.eq.s32.totalorder %s30, 0
      %p141 = por %p139, %p140
      %p142 = scmp.ne.s32.totalorder %s128, %s129
      %p143 = scmp.eq.s32.totalorder %s31, 15
      %p144 = por %p142, %p143
      %p146 = scmp.ne.s32.totalorder %s129, %s145
      %p147 = scmp.eq.s32.totalorder %s31, 0
      %p148 = por %p146, %p147
      %s149 = ssub.s32 %s33, %s40
      %p150 = scmp.eq.s32.totalorder %s149, 0
      %s152 = sadd.s32 %s151, 1
      %s153 = scalar_select %p150, %s151, %s152
      %p156 = pneg %p150
      %p157 = scmp.eq.s32.totalorder %s25, 15
      %p158 = por %p156, %p157
      %p159 = scmp.ne.s32.totalorder %s151, %s154
      %p160 = scmp.eq.s32.totalorder %s25, 0
      %p161 = por %p159, %p160
      %p162 = scmp.ne.s32.totalorder %s151, %s154
      %p163 = scmp.eq.s32.totalorder %s30, 15
      %p164 = por %p162, %p163
      %p165 = scmp.ne.s32.totalorder %s154, %s155
      %p166 = scmp.eq.s32.totalorder %s30, 0
      %p167 = por %p165, %p166
      %p168 = scmp.ne.s32.totalorder %s154, %s155
      %p169 = scmp.eq.s32.totalorder %s31, 15
      %p170 = por %p168, %p169
      %p172 = scmp.ne.s32.totalorder %s155, %s171
      %p173 = scmp.eq.s32.totalorder %s31, 0
      %p174 = por %p172, %p173
      %s175 = ssub.s32 %s33, %s40
      %p176 = scmp.eq.s32.totalorder %s175, 0
      %s178 = sadd.s32 %s177, 1
      %s179 = scalar_select %p176, %s177, %s178
      %p182 = pneg %p176
      %p183 = scmp.eq.s32.totalorder %s25, 15
      %p184 = por %p182, %p183
      %p185 = scmp.ne.s32.totalorder %s177, %s180
      %p186 = scmp.eq.s32.totalorder %s25, 0
      %p187 = por %p185, %p186
      %p188 = scmp.ne.s32.totalorder %s177, %s180
      %p189 = scmp.eq.s32.totalorder %s30, 15
      %p190 = por %p188, %p189
      %p191 = scmp.ne.s32.totalorder %s180, %s181
      %p192 = scmp.eq.s32.totalorder %s30, 0
      %p193 = por %p191, %p192
      %p194 = scmp.ne.s32.totalorder %s180, %s181
      %p195 = scmp.eq.s32.totalorder %s31, 15
      %p196 = por %p194, %p195
      %p198 = scmp.ne.s32.totalorder %s181, %s197
      %p199 = scmp.eq.s32.totalorder %s31, 0
      %p200 = por %p198, %p199
      %s201 = ssub.s32 %s33, %s40
      %p202 = scmp.eq.s32.totalorder %s201, 0
      %s204 = sadd.s32 %s203, 1
      %s205 = scalar_select %p202, %s203, %s204
      %p208 = pneg %p202
      %p209 = scmp.eq.s32.totalorder %s25, 15
      %p210 = por %p208, %p209
      %p211 = scmp.ne.s32.totalorder %s203, %s206
      %p212 = scmp.eq.s32.totalorder %s25, 0
      %p213 = por %p211, %p212
      %p214 = scmp.ne.s32.totalorder %s203, %s206
      %p215 = scmp.eq.s32.totalorder %s30, 15
      %p216 = por %p214, %p215
      %p217 = scmp.ne.s32.totalorder %s206, %s207
      %p218 = scmp.eq.s32.totalorder %s30, 0
      %p219 = por %p217, %p218
      %p220 = scmp.ne.s32.totalorder %s206, %s207
      %p221 = scmp.eq.s32.totalorder %s31, 15
      %p222 = por %p220, %p221
      %p224 = scmp.ne.s32.totalorder %s207, %s223
      %p225 = scmp.eq.s32.totalorder %s31, 0
      %p226 = por %p224, %p225
      %s227 = ssub.s32 %s33, %s40
      %p228 = scmp.eq.s32.totalorder %s227, 0
      %s230 = sadd.s32 %s229, 1
      %s231 = scalar_select %p228, %s229, %s230
      %p234 = pneg %p228
      %p235 = scmp.eq.s32.totalorder %s25, 15
      %p236 = por %p234, %p235
      %p237 = scmp.ne.s32.totalorder %s229, %s232
      %p238 = scmp.eq.s32.totalorder %s25, 0
      %p239 = por %p237, %p238
      %p240 = scmp.ne.s32.totalorder %s229, %s232
      %p241 = scmp.eq.s32.totalorder %s30, 15
      %p242 = por %p240, %p241
      %p243 = scmp.ne.s32.totalorder %s232, %s233
      %p244 = scmp.eq.s32.totalorder %s30, 0
      %p245 = por %p243, %p244
      %p246 = scmp.ne.s32.totalorder %s232, %s233
      %p247 = scmp.eq.s32.totalorder %s31, 15
      %p248 = por %p246, %p247
      %p250 = scmp.ne.s32.totalorder %s233, %s249
      %p251 = scmp.eq.s32.totalorder %s31, 0
      %p252 = por %p250, %p251
      %s253 = ssub.s32 %s33, %s40
      %p254 = scmp.eq.s32.totalorder %s253, 0
      %s256 = sadd.s32 %s255, 1
      %s257 = scalar_select %p254, %s255, %s256
      %p260 = pneg %p254
      %p261 = scmp.eq.s32.totalorder %s25, 15
      %p262 = por %p260, %p261
      %p263 = scmp.ne.s32.totalorder %s255, %s258
      %p264 = scmp.eq.s32.totalorder %s25, 0
      %p265 = por %p263, %p264
      %p266 = scmp.ne.s32.totalorder %s255, %s258
      %p267 = scmp.eq.s32.totalorder %s30, 15
      %p268 = por %p266, %p267
      %p269 = scmp.ne.s32.totalorder %s258, %s259
      %p270 = scmp.eq.s32.totalorder %s30, 0
      %p271 = por %p269, %p270
      %p272 = scmp.ne.s32.totalorder %s258, %s259
      %p273 = scmp.eq.s32.totalorder %s31, 15
      %p274 = por %p272, %p273
      %p276 = scmp.ne.s32.totalorder %s259, %s275
      %p277 = scmp.eq.s32.totalorder %s31, 0
      %p278 = por %p276, %p277
      %s279 = ssub.s32 %s33, %s40
      %p280 = scmp.eq.s32.totalorder %s279, 0
      %s282 = sadd.s32 %s281, 1
      %s283 = scalar_select %p280, %s281, %s282
      %p286 = pneg %p280
      %p287 = scmp.eq.s32.totalorder %s25, 15
      %p288 = por %p286, %p287
      %p289 = scmp.ne.s32.totalorder %s281, %s284
      %p290 = scmp.eq.s32.totalorder %s25, 0
      %p291 = por %p289, %p290
      %p292 = scmp.ne.s32.totalorder %s281, %s284
      %p293 = scmp.eq.s32.totalorder %s30, 15
      %p294 = por %p292, %p293
      %p295 = scmp.ne.s32.totalorder %s284, %s285
      %p296 = scmp.eq.s32.totalorder %s30, 0
      %p297 = por %p295, %p296
      %p298 = scmp.ne.s32.totalorder %s284, %s285
      %p299 = scmp.eq.s32.totalorder %s31, 15
      %p300 = por %p298, %p299
      %p302 = scmp.ne.s32.totalorder %s285, %s301
      %p303 = scmp.eq.s32.totalorder %s31, 0
      %p304 = por %p302, %p303
      %s305 = ssub.s32 %s33, %s40
      %p306 = scmp.eq.s32.totalorder %s305, 0
      %s308 = sadd.s32 %s307, 1
      %s309 = scalar_select %p306, %s307, %s308
      %p312 = pneg %p306
      %p313 = scmp.eq.s32.totalorder %s25, 15
      %p314 = por %p312, %p313
      %p315 = scmp.ne.s32.totalorder %s307, %s310
      %p316 = scmp.eq.s32.totalorder %s25, 0
      %p317 = por %p315, %p316
      %p318 = scmp.ne.s32.totalorder %s307, %s310
      %p319 = scmp.eq.s32.totalorder %s30, 15
      %p320 = por %p318, %p319
      %p321 = scmp.ne.s32.totalorder %s310, %s311
      %p322 = scmp.eq.s32.totalorder %s30, 0
      %p323 = por %p321, %p322
      %p324 = scmp.ne.s32.totalorder %s310, %s311
      %p325 = scmp.eq.s32.totalorder %s31, 15
      %p326 = por %p324, %p325
      %p328 = scmp.ne.s32.totalorder %s311, %s327
      %p329 = scmp.eq.s32.totalorder %s31, 0
      %p330 = por %p328, %p329
      %s331 = ssub.s32 %s33, %s40
      %p332 = scmp.eq.s32.totalorder %s331, 0
      %s334 = sadd.s32 %s333, 1
      %s335 = scalar_select %p332, %s333, %s334
      %p338 = pneg %p332
      %p339 = scmp.eq.s32.totalorder %s25, 15
      %p340 = por %p338, %p339
      %p341 = scmp.ne.s32.totalorder %s333, %s336
      %p342 = scmp.eq.s32.totalorder %s25, 0
      %p343 = por %p341, %p342
      %p344 = scmp.ne.s32.totalorder %s333, %s336
      %p345 = scmp.eq.s32.totalorder %s30, 15
      %p346 = por %p344, %p345
      %p347 = scmp.ne.s32.totalorder %s336, %s337
      %p348 = scmp.eq.s32.totalorder %s30, 0
      %p349 = por %p347, %p348
      %p350 = scmp.ne.s32.totalorder %s336, %s337
      %p351 = scmp.eq.s32.totalorder %s31, 15
      %p352 = por %p350, %p351
      %p354 = scmp.ne.s32.totalorder %s337, %s353
      %p355 = scmp.eq.s32.totalorder %s31, 0
      %p356 = por %p354, %p355
      %s358 = sadd.s32 %s357, 1
      %p361 = scmp.eq.s32.totalorder %s25, 15
      %p362 = scmp.ne.s32.totalorder %s357, %s359
      %p363 = scmp.eq.s32.totalorder %s25, 0
      %p364 = por %p362, %p363
      %p365 = scmp.ne.s32.totalorder %s357, %s359
      %p366 = scmp.eq.s32.totalorder %s30, 15
      %p367 = por %p365, %p366
      %p368 = scmp.ne.s32.totalorder %s359, %s360
      %p369 = scmp.eq.s32.totalorder %s30, 0
      %p370 = por %p368, %p369
      %p371 = scmp.ne.s32.totalorder %s359, %s360
      %p372 = scmp.eq.s32.totalorder %s31, 15
      %p373 = por %p371, %p372
      %p375 = scmp.ne.s32.totalorder %s360, %s374
      %p376 = scmp.eq.s32.totalorder %s31, 0
      %p377 = por %p375, %p376
      %s379 = sadd.s32 %s378, 1
      %p382 = scmp.eq.s32.totalorder %s25, 15
      %p383 = scmp.ne.s32.totalorder %s378, %s380
      %p384 = scmp.eq.s32.totalorder %s25, 0
      %p385 = por %p383, %p384
      %p386 = scmp.ne.s32.totalorder %s378, %s380
      %p387 = scmp.eq.s32.totalorder %s30, 15
      %p388 = por %p386, %p387
      %p389 = scmp.ne.s32.totalorder %s380, %s381
      %p390 = scmp.eq.s32.totalorder %s30, 0
      %p391 = por %p389, %p390
      %p392 = scmp.ne.s32.totalorder %s380, %s381
      %p393 = scmp.eq.s32.totalorder %s31, 15
      %p394 = por %p392, %p393
      %p396 = scmp.ne.s32.totalorder %s381, %s395
      %p397 = scmp.eq.s32.totalorder %s31, 0
      %p398 = por %p396, %p397
      %s400 = sadd.s32 %s399, 1
      %p403 = scmp.eq.s32.totalorder %s25, 15
      %p404 = scmp.ne.s32.totalorder %s399, %s401
      %p405 = scmp.eq.s32.totalorder %s25, 0
      %p406 = por %p404, %p405
      %p407 = scmp.ne.s32.totalorder %s399, %s401
      %p408 = scmp.eq.s32.totalorder %s30, 15
      %p409 = por %p407, %p408
      %p410 = scmp.ne.s32.totalorder %s401, %s402
      %p411 = scmp.eq.s32.totalorder %s30, 0
      %p412 = por %p410, %p411
      %p413 = scmp.ne.s32.totalorder %s401, %s402
      %p414 = scmp.eq.s32.totalorder %s31, 15
      %p415 = por %p413, %p414
      %p417 = scmp.ne.s32.totalorder %s402, %s416
      %p418 = scmp.eq.s32.totalorder %s31, 0
      %p419 = por %p417, %p418
      %s421 = sadd.s32 %s420, 1
      %p424 = scmp.eq.s32.totalorder %s25, 15
      %p425 = scmp.ne.s32.totalorder %s420, %s422
      %p426 = scmp.eq.s32.totalorder %s25, 0
      %p427 = por %p425, %p426
      %p428 = scmp.ne.s32.totalorder %s420, %s422
      %p429 = scmp.eq.s32.totalorder %s30, 15
      %p430 = por %p428, %p429
      %p431 = scmp.ne.s32.totalorder %s422, %s423
      %p432 = scmp.eq.s32.totalorder %s30, 0
      %p433 = por %p431, %p432
      %p434 = scmp.ne.s32.totalorder %s422, %s423
      %p435 = scmp.eq.s32.totalorder %s31, 15
      %p436 = por %p434, %p435
      %p438 = scmp.ne.s32.totalorder %s423, %s437
      %p439 = scmp.eq.s32.totalorder %s31, 0
      %p440 = por %p438, %p439
      %s441 = ssub.s32 %s32, %s44
      %p442 = scmp.eq.s32.totalorder %s441, 0
      %s444 = sadd.s32 %s443, 1
      %s445 = scalar_select %p442, %s443, %s444
      %p448 = pneg %p442
      %p449 = scmp.eq.s32.totalorder %s25, 15
      %p450 = por %p448, %p449
      %p451 = scmp.ne.s32.totalorder %s443, %s446
      %p452 = scmp.eq.s32.totalorder %s25, 0
      %p453 = por %p451, %p452
      %p454 = scmp.ne.s32.totalorder %s443, %s446
      %p455 = scmp.eq.s32.totalorder %s30, 15
      %p456 = por %p454, %p455
      %p457 = scmp.ne.s32.totalorder %s446, %s447
      %p458 = scmp.eq.s32.totalorder %s30, 0
      %p459 = por %p457, %p458
      %p460 = scmp.ne.s32.totalorder %s446, %s447
      %p461 = scmp.eq.s32.totalorder %s31, 15
      %p462 = por %p460, %p461
      %p464 = scmp.ne.s32.totalorder %s447, %s463
      %p465 = scmp.eq.s32.totalorder %s31, 0
      %p466 = por %p464, %p465
      %p467 = scmp.le.s32.totalorder 1, %s25
      %p468 = scmp.lt.s32.totalorder %s25, 17
      %p469 = pnand %p467, %p468
      %p470 = pneg %p469
      // Predicated region
      $region9: #{transformer_language_model.1} parent=5 // pred_check
        _
      $region10: #{transformer_language_model.1} parent=5 // pred_check_branch
        %472 = sbr.rel (%p469) target = $region12
      $region11: #{transformer_language_model.1} parent=5 // pred_region
        %s473 = ssub.s32 %s25, 1
        // Predicated region
        $region13: #{transformer_language_model.1} parent=11 // pred_check
          %p474 = pneg %p370
        $region14: #{transformer_language_model.1} parent=11 // pred_check_branch
          %476 = sbr.rel (%p474) target = $region16
        $region15: #{transformer_language_model.1} parent=11 // pred_region
          _
        $region16: #{transformer_language_model.1} parent=11 // pred_fallthru
          _
        // Predicated region
        $region17: #{transformer_language_model.1} parent=11 // pred_check
          %p477 = pneg %p391
        $region18: #{transformer_language_model.1} parent=11 // pred_check_branch
          %479 = sbr.rel (%p477) target = $region20
        $region19: #{transformer_language_model.1} parent=11 // pred_region
          _
        $region20: #{transformer_language_model.1} parent=11 // pred_fallthru
          _
        // Predicated region
        $region21: #{transformer_language_model.1} parent=11 // pred_check
          %p480 = pneg %p412
        $region22: #{transformer_language_model.1} parent=11 // pred_check_branch
          %482 = sbr.rel (%p480) target = $region24
        $region23: #{transformer_language_model.1} parent=11 // pred_region
          _
        $region24: #{transformer_language_model.1} parent=11 // pred_fallthru
          _
        // Predicated region
        $region25: #{transformer_language_model.1} parent=11 // pred_check
          %p483 = pneg %p433
        $region26: #{transformer_language_model.1} parent=11 // pred_check_branch
          %485 = sbr.rel (%p483) target = $region28
        $region27: #{transformer_language_model.1} parent=11 // pred_region
          _
        $region28: #{transformer_language_model.1} parent=11 // pred_fallthru
          _
      $region12: #{transformer_language_model.1} parent=5 // pred_fallthru
        _
      %p486 = scmp.lt.s32.totalorder %s25, 16
      // Predicated region
      $region29: #{transformer_language_model.1} parent=5 // pred_check
        %p487 = pneg %p486
      $region30: #{transformer_language_model.1} parent=5 // pred_check_branch
        %489 = sbr.rel (%p487) target = $region32
      $region31: #{transformer_language_model.1} parent=5 // pred_region
        // Predicated region
        $region33: #{transformer_language_model.1} parent=31 // pred_check
          %p490 = pneg %p57
        $region34: #{transformer_language_model.1} parent=31 // pred_check_branch
          %492 = sbr.rel (%p490) target = $region36
        $region35: #{transformer_language_model.1} parent=31 // pred_region
          %s493 = smul.u32 2, %s32
          %p494 = scmp.lt.s32.totalorder %s493, 3
          %s495 = scalar_select %p494, %s493, 3
          %s496 = smul.addr %s495, 8
          %s497 = scalar_lea.vmem %s0, %s496
          %s498 = smul.u32 2, %s32
        $region36: #{transformer_language_model.1} parent=31 // pred_fallthru
          _
        // Predicated region
        $region37: #{transformer_language_model.1} parent=31 // pred_check
          %p499 = pneg %p83
        $region38: #{transformer_language_model.1} parent=31 // pred_check_branch
          %501 = sbr.rel (%p499) target = $region40
        $region39: #{transformer_language_model.1} parent=31 // pred_region
          %p502 = scmp.lt.s32.totalorder %s33, 7
          %s503 = scalar_select %p502, %s33, 7
          %s504 = scalar_lea.vmem %s1, %s503
        $region40: #{transformer_language_model.1} parent=31 // pred_fallthru
          _
        // Predicated region
        $region41: #{transformer_language_model.1} parent=31 // pred_check
          %p505 = pneg %p109
        $region42: #{transformer_language_model.1} parent=31 // pred_check_branch
          %507 = sbr.rel (%p505) target = $region44
        $region43: #{transformer_language_model.1} parent=31 // pred_region
          %p508 = scmp.lt.s32.totalorder %s33, 7
          %s509 = scalar_select %p508, %s33, 7
          %s510 = scalar_lea.vmem %s2, %s509
        $region44: #{transformer_language_model.1} parent=31 // pred_fallthru
          _
        // Predicated region
        $region45: #{transformer_language_model.1} parent=31 // pred_check
          %p511 = pneg %p135
        $region46: #{transformer_language_model.1} parent=31 // pred_check_branch
          %513 = sbr.rel (%p511) target = $region48
        $region47: #{transformer_language_model.1} parent=31 // pred_region
          %p514 = scmp.lt.s32.totalorder %s33, 7
          %s515 = scalar_select %p514, %s33, 7
          %s516 = smul.addr %s515, 32
          %s517 = smul.addr %s516, 4
          %s518 = scalar_lea.vmem %s3, %s517
        $region48: #{transformer_language_model.1} parent=31 // pred_fallthru
          _
        // Predicated region
        $region49: #{transformer_language_model.1} parent=31 // pred_check
          %p519 = pneg %p161
        $region50: #{transformer_language_model.1} parent=31 // pred_check_branch
          %521 = sbr.rel (%p519) target = $region52
        $region51: #{transformer_language_model.1} parent=31 // pred_region
          %p522 = scmp.lt.s32.totalorder %s33, 7
          %s523 = scalar_select %p522, %s33, 7
          %s524 = smul.addr %s523, 8
          %s525 = smul.addr %s524, 4
          %s526 = scalar_lea.vmem %s4, %s525
        $region52: #{transformer_language_model.1} parent=31 // pred_fallthru
          _
        // Predicated region
        $region53: #{transformer_language_model.1} parent=31 // pred_check
          %p527 = pneg %p187
        $region54: #{transformer_language_model.1} parent=31 // pred_check_branch
          %529 = sbr.rel (%p527) target = $region56
        $region55: #{transformer_language_model.1} parent=31 // pred_region
          %p530 = scmp.lt.s32.totalorder %s33, 7
          %s531 = scalar_select %p530, %s33, 7
          %s532 = scalar_lea.vmem %s5, %s531
        $region56: #{transformer_language_model.1} parent=31 // pred_fallthru
          _
        // Predicated region
        $region57: #{transformer_language_model.1} parent=31 // pred_check
          %p533 = pneg %p213
        $region58: #{transformer_language_model.1} parent=31 // pred_check_branch
          %535 = sbr.rel (%p533) target = $region60
        $region59: #{transformer_language_model.1} parent=31 // pred_region
          %p536 = scmp.lt.s32.totalorder %s33, 7
          %s537 = scalar_select %p536, %s33, 7
          %s538 = scalar_lea.vmem %s6, %s537
        $region60: #{transformer_language_model.1} parent=31 // pred_fallthru
          _
        // Predicated region
        $region61: #{transformer_language_model.1} parent=31 // pred_check
          %p539 = pneg %p239
        $region62: #{transformer_language_model.1} parent=31 // pred_check_branch
          %541 = sbr.rel (%p539) target = $region64
        $region63: #{transformer_language_model.1} parent=31 // pred_region
          %p542 = scmp.lt.s32.totalorder %s33, 7
          %s543 = scalar_select %p542, %s33, 7
          %s544 = scalar_lea.vmem %s7, %s543
        $region64: #{transformer_language_model.1} parent=31 // pred_fallthru
          _
        // Predicated region
        $region65: #{transformer_language_model.1} parent=31 // pred_check
          %p545 = pneg %p265
        $region66: #{transformer_language_model.1} parent=31 // pred_check_branch
          %547 = sbr.rel (%p545) target = $region68
        $region67: #{transformer_language_model.1} parent=31 // pred_region
          %p548 = scmp.lt.s32.totalorder %s33, 7
          %s549 = scalar_select %p548, %s33, 7
          %s550 = smul.addr %s549, 16
          %s551 = smul.addr %s550, 4
          %s552 = scalar_lea.vmem %s8, %s551
        $region68: #{transformer_language_model.1} parent=31 // pred_fallthru
          _
        // Predicated region
        $region69: #{transformer_language_model.1} parent=31 // pred_check
          %p553 = pneg %p291
        $region70: #{transformer_language_model.1} parent=31 // pred_check_branch
          %555 = sbr.rel (%p553) target = $region72
        $region71: #{transformer_language_model.1} parent=31 // pred_region
          %p556 = scmp.lt.s32.totalorder %s33, 7
          %s557 = scalar_select %p556, %s33, 7
          %s558 = smul.addr %s557, 2
          %s559 = scalar_lea.vmem %s9, %s558
        $region72: #{transformer_language_model.1} parent=31 // pred_fallthru
          _
        // Predicated region
        $region73: #{transformer_language_model.1} parent=31 // pred_check
          %p560 = pneg %p317
        $region74: #{transformer_language_model.1} parent=31 // pred_check_branch
          %562 = sbr.rel (%p560) target = $region76
        $region75: #{transformer_language_model.1} parent=31 // pred_region
          %p563 = scmp.lt.s32.totalorder %s33, 7
          %s564 = scalar_select %p563, %s33, 7
          %s565 = smul.addr %s564, 32
          %s566 = smul.addr %s565, 4
          %s567 = scalar_lea.vmem %s10, %s566
        $region76: #{transformer_language_model.1} parent=31 // pred_fallthru
          _
        // Predicated region
        $region77: #{transformer_language_model.1} parent=31 // pred_check
          %p568 = pneg %p343
        $region78: #{transformer_language_model.1} parent=31 // pred_check_branch
          %570 = sbr.rel (%p568) target = $region80
        $region79: #{transformer_language_model.1} parent=31 // pred_region
          %p571 = scmp.lt.s32.totalorder %s33, 7
          %s572 = scalar_select %p571, %s33, 7
          %s573 = scalar_lea.vmem %s11, %s572
        $region80: #{transformer_language_model.1} parent=31 // pred_fallthru
          _
      $region32: #{transformer_language_model.1} parent=5 // pred_fallthru
        _
      %p574 = scmp.le.s32.totalorder 1, %s25
      %p575 = scmp.lt.s32.totalorder %s25, 17
      %p576 = pnand %p574, %p575
      %p577 = pneg %p576
      // Predicated region
      $region81: #{transformer_language_model.1} parent=5 // pred_check
        _
      $region82: #{transformer_language_model.1} parent=5 // pred_check_branch
        %579 = sbr.rel (%p576) target = $region84
      $region83: #{transformer_language_model.1} parent=5 // pred_region
        %s580 = ssub.s32 %s25, 1
        %s581 = smul.u32 2, %s34
        %p582 = scmp.lt.s32.totalorder %s581, 3
        %s583 = scalar_select %p582, %s581, 3
        %s584 = smul.addr %s583, 8
        %s585 = scalar_lea.vmem %s0, %s584
        %p586 = pneg %p63
        %p587 = pneg %p60
        %p588 = scmp.lt.s32.totalorder %s35, 7
        %s589 = scalar_select %p588, %s35, 7
        %s590 = scalar_lea.vmem %s1, %s589
        %p591 = pneg %p89
        %p592 = pneg %p86
        %p593 = scmp.lt.s32.totalorder %s35, 7
        %s594 = scalar_select %p593, %s35, 7
        %s595 = scalar_lea.vmem %s2, %s594
        %p596 = pneg %p115
        %p597 = pneg %p112
        %p598 = scmp.lt.s32.totalorder %s35, 7
        %s599 = scalar_select %p598, %s35, 7
        %s600 = smul.addr %s599, 32
        %s601 = smul.addr %s600, 4
        %s602 = scalar_lea.vmem %s3, %s601
        %p603 = pneg %p141
        %p604 = pneg %p138
        %p605 = scmp.lt.s32.totalorder %s35, 7
        %s606 = scalar_select %p605, %s35, 7
        %s607 = smul.addr %s606, 8
        %s608 = smul.addr %s607, 4
        %s609 = scalar_lea.vmem %s4, %s608
        %p610 = pneg %p167
        %p611 = pneg %p164
        %p612 = scmp.lt.s32.totalorder %s35, 7
        %s613 = scalar_select %p612, %s35, 7
        %s614 = scalar_lea.vmem %s5, %s613
        %p615 = pneg %p193
        %p616 = pneg %p190
        %p617 = scmp.lt.s32.totalorder %s35, 7
        %s618 = scalar_select %p617, %s35, 7
        %s619 = scalar_lea.vmem %s6, %s618
        %p620 = pneg %p219
        %p621 = pneg %p216
        %p622 = scmp.lt.s32.totalorder %s35, 7
        %s623 = scalar_select %p622, %s35, 7
        %s624 = scalar_lea.vmem %s7, %s623
        %p625 = pneg %p245
        %p626 = pneg %p242
        %p627 = scmp.lt.s32.totalorder %s35, 7
        %s628 = scalar_select %p627, %s35, 7
        %s629 = smul.addr %s628, 16
        %s630 = smul.addr %s629, 4
        %s631 = scalar_lea.vmem %s8, %s630
        %p632 = pneg %p271
        %p633 = pneg %p268
        %p634 = scmp.lt.s32.totalorder %s35, 7
        %s635 = scalar_select %p634, %s35, 7
        %s636 = smul.addr %s635, 2
        %s637 = scalar_lea.vmem %s9, %s636
        %p638 = pneg %p297
        %p639 = pneg %p294
        %p640 = scmp.lt.s32.totalorder %s35, 7
        %s641 = scalar_select %p640, %s35, 7
        %s642 = smul.addr %s641, 32
        %s643 = smul.addr %s642, 4
        %s644 = scalar_lea.vmem %s10, %s643
        %p645 = pneg %p323
        %p646 = pneg %p320
        %p647 = scmp.lt.s32.totalorder %s35, 7
        %s648 = scalar_select %p647, %s35, 7
        %s649 = scalar_lea.vmem %s11, %s648
        %p650 = pneg %p349
        %p651 = pneg %p346
        %p652 = pneg %p370
        %p653 = pneg %p367
        %p654 = pneg %p391
        %p655 = pneg %p388
        %p656 = pneg %p412
        %p657 = pneg %p409
        %p658 = pneg %p433
        %p659 = pneg %p430
        %p660 = pneg %p459
        %p661 = pneg %p456
        %s662 = sand.u32 %s446, 1
        %s663 = scalar_lea.sflag [#allocation4], %s662
        %s664 = sand.u32 %s446, 1
        %s665 = smul.addr %s664, 16
        %s666 = scalar_lea.vmem [#allocation3], %s665
        %s667 = smul.u32 2, %s34
        %p668 = scmp.lt.s32.totalorder %s667, 3
        %s669 = scalar_select %p668, %s667, 3
        %s670 = smul.addr %s669, 8
        %s671 = scalar_lea.vmem %s0, %s670
        %s672 = smul.u32 2, %s34
        %p673 = scmp.lt.s32.totalorder %s35, 7
        %s674 = scalar_select %p673, %s35, 7
        %s675 = scalar_lea.vmem %s1, %s674
        %p676 = scmp.lt.s32.totalorder %s35, 7
        %s677 = scalar_select %p676, %s35, 7
        %s678 = scalar_lea.vmem %s2, %s677
        %p679 = scmp.lt.s32.totalorder %s35, 7
        %s680 = scalar_select %p679, %s35, 7
        %s681 = smul.addr %s680, 32
        %s682 = smul.addr %s681, 4
        %s683 = scalar_lea.vmem %s3, %s682
        %p684 = scmp.lt.s32.totalorder %s35, 7
        %s685 = scalar_select %p684, %s35, 7
        %s686 = smul.addr %s685, 8
        %s687 = smul.addr %s686, 4
        %s688 = scalar_lea.vmem %s4, %s687
        %p689 = scmp.lt.s32.totalorder %s35, 7
        %s690 = scalar_select %p689, %s35, 7
        %s691 = scalar_lea.vmem %s5, %s690
        %p692 = scmp.lt.s32.totalorder %s35, 7
        %s693 = scalar_select %p692, %s35, 7
        %s694 = scalar_lea.vmem %s6, %s693
        %p695 = scmp.lt.s32.totalorder %s35, 7
        %s696 = scalar_select %p695, %s35, 7
        %s697 = scalar_lea.vmem %s7, %s696
        %p698 = scmp.lt.s32.totalorder %s35, 7
        %s699 = scalar_select %p698, %s35, 7
        %s700 = smul.addr %s699, 16
        %s701 = smul.addr %s700, 4
        %s702 = scalar_lea.vmem %s8, %s701
        %p703 = scmp.lt.s32.totalorder %s35, 7
        %s704 = scalar_select %p703, %s35, 7
        %s705 = smul.addr %s704, 2
        %s706 = scalar_lea.vmem %s9, %s705
        %p707 = scmp.lt.s32.totalorder %s35, 7
        %s708 = scalar_select %p707, %s35, 7
        %s709 = smul.addr %s708, 32
        %s710 = smul.addr %s709, 4
        %s711 = scalar_lea.vmem %s10, %s710
        %p712 = scmp.lt.s32.totalorder %s35, 7
        %s713 = scalar_select %p712, %s35, 7
        %s714 = scalar_lea.vmem %s11, %s713
        %s715 = smul.u32 2, %s34
        %p717 = scmp.eq.s32.totalorder %s35, 0
        // Predicated region
        $region85: #{transformer_language_model.1} parent=83 // pred_check
          %p718 = pneg %p717
        $region86: #{transformer_language_model.1} parent=83 // pred_check_branch
          %720 = sbr.rel (%p718) target = $region88
        $region87: #{transformer_language_model.1} parent=83 // pred_region
          %v721 = vld [vmem:[%s671] sm:$0xff]
          %v722 = vld [vmem:[%s671 + $0x8] sm:$0xff]
          %vm723 = vcmask 523264
          %724 = vst.msk [vmem:[#allocation2] sm:$0xff] %vm723, %v721
          %725 = vst.msk [vmem:[#allocation2 + $0x8] sm:$0xff] %vm723, %v722
        $region88: #{transformer_language_model.1} parent=83 // pred_fallthru
          _
        %v726 = vld [vmem:[#allocation2] sm:$0xff]
        %v727 = vld [vmem:[#allocation2 + $0x8] sm:$0xff]
        %v728 = vlaneseq
        %v729 = vshrl.u32 %v728, 7
        %v730 = vadd.s32 %v729, 8
        %v731 = vlaneseq
        %v732 = vand.u32 %v731, 127
        %vm733 = vcmp.le.s32.totalorder %v732, %v729
        %vm734 = vcmp.le.s32.totalorder %v732, %v730
        %v735 = vsel %vm733, 0.0, -1e+30
        %v736 = vsel %vm734, 0.0, -1e+30
        %v737 = vld [vmem:[%s675] sm:$0x1]
        %v738 = vld [vmem:[%s678] sm:$0x1]
        %vm739 = vcmask 523264
        %v740 = vsel %vm739, %v726, 0.0
        %741 = vadd.xlane.f32.xlu0 %v740
        %v742 = vpop.xlane.xlu0 %741
        %v743 = vsel %vm739, %v727, 0.0
        %744 = vadd.xlane.f32.xlu0 %v743
        %v745 = vpop.xlane.xlu0 %744
        %v746 = vmul.f32 %v726, %v726
        %v747 = vmul.f32 %v727, %v727
        %v748 = vsel %vm739, %v746, 0.0
        %749 = vadd.xlane.f32.xlu0 %v748
        %v750 = vpop.xlane.xlu0 %749
        %v751 = vsel %vm739, %v747, 0.0
        %752 = vadd.xlane.f32.xlu0 %v751
        %v753 = vpop.xlane.xlu0 %752
        %v754 = vmul.f32 %v742, 0.015625
        %v755 = vmul.f32 %v745, 0.015625
        %v756 = vmul.f32 %v750, 0.015625
        %v757 = vmul.f32 %v753, 0.015625
        %v758 = vmul.f32 %v754, %v754
        %v759 = vmul.f32 %v755, %v755
        %v760 = vsub.f32 %v756, %v758
        %v761 = vsub.f32 %v757, %v759
        %v762 = vsub.f32 %v726, %v754
        %v763 = vsub.f32 %v727, %v755
        %v764 = vadd.f32 %v760, 1e-05
        %v765 = vadd.f32 %v761, 1e-05
        %v766 = vrsqrt.pop %v764
        %v767 = vmul.f32 %v766, %v764
        %v768 = vmul.f32 %v767, %v766
        %v769 = vmul.f32 0.5, %v768
        %v770 = vsub.f32 1.5, %v769
        %v771 = vmul.f32 %v766, %v770
        %vm772 = vweird.f32 %v764
        %vm773 = vweird.f32 %v766
        %vm774 = vmor %vm772, %vm773
        %v775 = vsel %vm774, %v766, %v771
        %v776 = vrsqrt.pop %v765
        %v777 = vmul.f32 %v776, %v765
        %v778 = vmul.f32 %v777, %v776
        %v779 = vmul.f32 0.5, %v778
        %v780 = vsub.f32 1.5, %v779
        %v781 = vmul.f32 %v776, %v780
        %vm782 = vweird.f32 %v765
        %vm783 = vweird.f32 %v776
        %vm784 = vmor %vm782, %vm783
        %v785 = vsel %vm784, %v776, %v781
        %v786 = vmul.f32 %v762, %v775
        %v787 = vmul.f32 %v763, %v785
        %v789 = vperm.slane %v737, 0
        %v791 = vmul.f32 %v786, %v789
        %v792 = vmul.f32 %v787, %v789
        %v794 = vperm.slane %v738, 0
        %v796 = vadd.f32 %v791, %v794
        %v797 = vadd.f32 %v792, %v794
        %v798 = vpack.c.bf16 %v796, %v796
        %v799 = vpack.c.bf16 %v797, %v797
        %v800 = vld [vmem:[%s683] sm:$0xf]
        %v801 = vld [vmem:[%s683 + $0x4] sm:$0xf]
        %v802 = vld [vmem:[%s683 + $0x8] sm:$0xf]
        %v803 = vld [vmem:[%s683 + $0xc] sm:$0xf]
        %v804 = vld [vmem:[%s683 + $0x10] sm:$0xf]
        %v805 = vld [vmem:[%s683 + $0x14] sm:$0xf]
        %v806 = vld [vmem:[%s683 + $0x18] sm:$0xf]
        %v807 = vld [vmem:[%s683 + $0x1c] sm:$0xf]
        %v808 = vld [vmem:[%s683 + $0x20] sm:$0xf]
        %v809 = vld [vmem:[%s683 + $0x24] sm:$0xf]
        %v810 = vld [vmem:[%s683 + $0x28] sm:$0xf]
        %v811 = vld [vmem:[%s683 + $0x2c] sm:$0xf]
        %v812 = vld [vmem:[%s683 + $0x30] sm:$0xf]
        %v813 = vld [vmem:[%s683 + $0x34] sm:$0xf]
        %v814 = vld [vmem:[%s683 + $0x38] sm:$0xf]
        %v815 = vld [vmem:[%s683 + $0x3c] sm:$0xf]
        %v816 = vld [vmem:[%s683 + $0x40] sm:$0xf]
        %v817 = vld [vmem:[%s683 + $0x44] sm:$0xf]
        %v818 = vld [vmem:[%s683 + $0x48] sm:$0xf]
        %v819 = vld [vmem:[%s683 + $0x4c] sm:$0xf]
        %v820 = vld [vmem:[%s683 + $0x50] sm:$0xf]
        %v821 = vld [vmem:[%s683 + $0x54] sm:$0xf]
        %v822 = vld [vmem:[%s683 + $0x58] sm:$0xf]
        %v823 = vld [vmem:[%s683 + $0x5c] sm:$0xf]
        %v824 = vld [vmem:[%s683 + $0x60] sm:$0xf]
        %v825 = vld [vmem:[%s683 + $0x64] sm:$0xf]
        %v826 = vld [vmem:[%s683 + $0x68] sm:$0xf]
        %v827 = vld [vmem:[%s683 + $0x6c] sm:$0xf]
        %v828 = vld [vmem:[%s683 + $0x70] sm:$0xf]
        %v829 = vld [vmem:[%s683 + $0x74] sm:$0xf]
        %v830 = vld [vmem:[%s683 + $0x78] sm:$0xf]
        %v831 = vld [vmem:[%s683 + $0x7c] sm:$0xf]
        %v834 = vunpack.c.l.b16 %v798
        %v835 = vunpack.c.l.b16 %v799
        %v836 = vpack.c.b16 %v835, %v834
        %v845 = vunpack.c.l.b16 %v800
        %v846 = vunpack.c.l.b16 %v801
        %v847 = vunpack.c.l.b16 %v802
        %v848 = vunpack.c.l.b16 %v803
        %v849 = vunpack.c.l.b16 %v804
        %v850 = vunpack.c.l.b16 %v805
        %v851 = vunpack.c.l.b16 %v806
        %v852 = vunpack.c.l.b16 %v807
        %v853 = vpack.c.b16 %v846, %v845
        %v854 = vpack.c.b16 %v848, %v847
        %v855 = vpack.c.b16 %v850, %v849
        %v856 = vpack.c.b16 %v852, %v851
        %v862 = vsel %vm739, %v836, 0
        %864 = vmatpush.bf16.msra.mxu0 0
        %865 = vmatpush.bf16.msra.mxu0 0
        %866 = vmatpush.bf16.msra.mxu0 0
        %867 = vmatpush.bf16.msra.mxu0 0
        %868 = vmatpush.bf16.msra.mxu0 %v856
        %869 = vmatpush.bf16.msra.mxu0 %v855
        %870 = vmatpush.bf16.msra.mxu0 %v854
        %871 = vmatpush.bf16.msra.mxu0 %v853
        %872 = vmatmul.bf16.gmra.mxu0 %v862
        %v873 = vpop.f32.mrf.mxu0
        %v874 = vadd.f32 0.0, %v873
        %v875 = vpop.f32.mrf.mxu0
        %v876 = vadd.f32 0.0, %v875
        %877 = vdwg.mxu0
        %v886 = vunpack.c.l.b16 %v808
        %v887 = vunpack.c.l.b16 %v809
        %v888 = vunpack.c.l.b16 %v810
        %v889 = vunpack.c.l.b16 %v811
        %v890 = vunpack.c.l.b16 %v812
        %v891 = vunpack.c.l.b16 %v813
        %v892 = vunpack.c.l.b16 %v814
        %v893 = vunpack.c.l.b16 %v815
        %v894 = vpack.c.b16 %v887, %v886
        %v895 = vpack.c.b16 %v889, %v888
        %v896 = vpack.c.b16 %v891, %v890
        %v897 = vpack.c.b16 %v893, %v892
        %902 = vmatpush.bf16.msra.mxu0 0
        %903 = vmatpush.bf16.msra.mxu0 0
        %904 = vmatpush.bf16.msra.mxu0 0
        %905 = vmatpush.bf16.msra.mxu0 0
        %906 = vmatpush.bf16.msra.mxu0 %v897
        %907 = vmatpush.bf16.msra.mxu0 %v896
        %908 = vmatpush.bf16.msra.mxu0 %v895
        %909 = vmatpush.bf16.msra.mxu0 %v894
        %910 = vmatmul.bf16.gmra.mxu0 %v862
        %v911 = vpop.f32.mrf.mxu0
        %v912 = vadd.f32 0.0, %v911
        %v913 = vpop.f32.mrf.mxu0
        %v914 = vadd.f32 0.0, %v913
        %915 = vdwg.mxu0
        %v924 = vunpack.c.l.b16 %v816
        %v925 = vunpack.c.l.b16 %v817
        %v926 = vunpack.c.l.b16 %v818
        %v927 = vunpack.c.l.b16 %v819
        %v928 = vunpack.c.l.b16 %v820
        %v929 = vunpack.c.l.b16 %v821
        %v930 = vunpack.c.l.b16 %v822
        %v931 = vunpack.c.l.b16 %v823
        %v932 = vpack.c.b16 %v925, %v924
        %v933 = vpack.c.b16 %v927, %v926
        %v934 = vpack.c.b16 %v929, %v928
        %v935 = vpack.c.b16 %v931, %v930
        %940 = vmatpush.bf16.msra.mxu0 0
        %941 = vmatpush.bf16.msra.mxu0 0
        %942 = vmatpush.bf16.msra.mxu0 0
        %943 = vmatpush.bf16.msra.mxu0 0
        %944 = vmatpush.bf16.msra.mxu0 %v935
        %945 = vmatpush.bf16.msra.mxu0 %v934
        %946 = vmatpush.bf16.msra.mxu0 %v933
        %947 = vmatpush.bf16.msra.mxu0 %v932
        %948 = vmatmul.bf16.gmra.mxu0 %v862
        %v949 = vpop.f32.mrf.mxu0
        %v950 = vadd.f32 0.0, %v949
        %v951 = vpop.f32.mrf.mxu0
        %v952 = vadd.f32 0.0, %v951
        %953 = vdwg.mxu0
        %v962 = vunpack.c.l.b16 %v824
        %v963 = vunpack.c.l.b16 %v825
        %v964 = vunpack.c.l.b16 %v826
        %v965 = vunpack.c.l.b16 %v827
        %v966 = vunpack.c.l.b16 %v828
        %v967 = vunpack.c.l.b16 %v829
        %v968 = vunpack.c.l.b16 %v830
        %v969 = vunpack.c.l.b16 %v831
        %v970 = vpack.c.b16 %v963, %v962
        %v971 = vpack.c.b16 %v965, %v964
        %v972 = vpack.c.b16 %v967, %v966
        %v973 = vpack.c.b16 %v969, %v968
        %978 = vmatpush.bf16.msra.mxu0 0
        %979 = vmatpush.bf16.msra.mxu0 0
        %980 = vmatpush.bf16.msra.mxu0 0
        %981 = vmatpush.bf16.msra.mxu0 0
        %982 = vmatpush.bf16.msra.mxu0 %v973
        %983 = vmatpush.bf16.msra.mxu0 %v972
        %984 = vmatpush.bf16.msra.mxu0 %v971
        %985 = vmatpush.bf16.msra.mxu0 %v970
        %986 = vmatmul.bf16.gmra.mxu0 %v862
        %v987 = vpop.f32.mrf.mxu0
        %v988 = vadd.f32 0.0, %v987
        %v989 = vpop.f32.mrf.mxu0
        %v990 = vadd.f32 0.0, %v989
        %991 = vdwg.mxu0
        %994 = vrot.lane.b32.xlu0 %v874, 112
        %v995 = vpop.permute.xlu0 %994
        %996 = vrot.lane.b32.xlu0 %v876, 112
        %v997 = vpop.permute.xlu0 %996
        %vm998 = vcmask 130048
        %v999 = vsel %vm998, %v874, 0
        %v1001 = vsel %vm998, %v876, 0
        %v1003 = vsel %vm998, %v995, 0
        %v1005 = vsel %vm998, %v997, 0
        %1007 = vmatpush.xpose.msra.mxu0 0.0
        %1008 = vmatpush.xpose.msra.mxu0 0.0
        %1009 = vmatpush.xpose.msra.mxu0 0.0
        %1010 = vmatpush.xpose.msra.mxu0 0.0
        %1011 = vmatpush.xpose.msra.mxu0 0.0
        %1012 = vmatpush.xpose.msra.mxu0 0.0
        %1013 = vmatpush.xpose.msra.mxu0 0.0
        %1014 = vmatpush.xpose.msra.mxu0 0.0
        %1015 = vmatpush.xpose.msra.mxu0 0.0
        %1016 = vmatpush.xpose.msra.mxu0 0.0
        %1017 = vmatpush.xpose.msra.mxu0 0.0
        %1018 = vmatpush.xpose.msra.mxu0 0.0
        %1019 = vmatpush.xpose.msra.mxu0 0.0
        %1020 = vmatpush.xpose.msra.mxu0 0.0
        %1021 = vmatpush.xpose.msra.mxu0 %v1005
        %1022 = vmatpush.xpose.msra.mxu0 %v1003
        %1023 = vmatmul.f32.gmra.mxu0 %v999
        %v1024 = vpop.f32.mrf.mxu0
        %v1025 = vadd.f32 %v735, %v1024
        %1026 = vmatmul.f32.gmra.mxu0 %v1001
        %v1027 = vpop.f32.mrf.mxu0
        %v1028 = vadd.f32 %v736, %v1027
        %1029 = vdwg.mxu0
        %1032 = vrot.lane.b32.xlu0 %v912, 112
        %v1033 = vpop.permute.xlu0 %1032
        %1034 = vrot.lane.b32.xlu0 %v914, 112
        %v1035 = vpop.permute.xlu0 %1034
        %v1036 = vsel %vm998, %v912, 0
        %v1038 = vsel %vm998, %v914, 0
        %v1040 = vsel %vm998, %v1033, 0
        %v1042 = vsel %vm998, %v1035, 0
        %1044 = vmatpush.xpose.msra.mxu0 0.0
        %1045 = vmatpush.xpose.msra.mxu0 0.0
        %1046 = vmatpush.xpose.msra.mxu0 0.0
        %1047 = vmatpush.xpose.msra.mxu0 0.0
        %1048 = vmatpush.xpose.msra.mxu0 0.0
        %1049 = vmatpush.xpose.msra.mxu0 0.0
        %1050 = vmatpush.xpose.msra.mxu0 0.0
        %1051 = vmatpush.xpose.msra.mxu0 0.0
        %1052 = vmatpush.xpose.msra.mxu0 0.0
        %1053 = vmatpush.xpose.msra.mxu0 0.0
        %1054 = vmatpush.xpose.msra.mxu0 0.0
        %1055 = vmatpush.xpose.msra.mxu0 0.0
        %1056 = vmatpush.xpose.msra.mxu0 0.0
        %1057 = vmatpush.xpose.msra.mxu0 0.0
        %1058 = vmatpush.xpose.msra.mxu0 %v1042
        %1059 = vmatpush.xpose.msra.mxu0 %v1040
        %1060 = vmatmul.f32.gmra.mxu0 %v1036
        %v1061 = vpop.f32.mrf.mxu0
        %v1062 = vadd.f32 %v735, %v1061
        %1063 = vmatmul.f32.gmra.mxu0 %v1038
        %v1064 = vpop.f32.mrf.mxu0
        %v1065 = vadd.f32 %v736, %v1064
        %1066 = vdwg.mxu0
        %1069 = vrot.lane.b32.xlu0 %v950, 112
        %v1070 = vpop.permute.xlu0 %1069
        %1071 = vrot.lane.b32.xlu0 %v952, 112
        %v1072 = vpop.permute.xlu0 %1071
        %v1073 = vsel %vm998, %v950, 0
        %v1075 = vsel %vm998, %v952, 0
        %v1077 = vsel %vm998, %v1070, 0
        %v1079 = vsel %vm998, %v1072, 0
        %1081 = vmatpush.xpose.msra.mxu0 0.0
        %1082 = vmatpush.xpose.msra.mxu0 0.0
        %1083 = vmatpush.xpose.msra.mxu0 0.0
        %1084 = vmatpush.xpose.msra.mxu0 0.0
        %1085 = vmatpush.xpose.msra.mxu0 0.0
        %1086 = vmatpush.xpose.msra.mxu0 0.0
        %1087 = vmatpush.xpose.msra.mxu0 0.0
        %1088 = vmatpush.xpose.msra.mxu0 0.0
        %1089 = vmatpush.xpose.msra.mxu0 0.0
        %1090 = vmatpush.xpose.msra.mxu0 0.0
        %1091 = vmatpush.xpose.msra.mxu0 0.0
        %1092 = vmatpush.xpose.msra.mxu0 0.0
        %1093 = vmatpush.xpose.msra.mxu0 0.0
        %1094 = vmatpush.xpose.msra.mxu0 0.0
        %1095 = vmatpush.xpose.msra.mxu0 %v1079
        %1096 = vmatpush.xpose.msra.mxu0 %v1077
        %1097 = vmatmul.f32.gmra.mxu0 %v1073
        %v1098 = vpop.f32.mrf.mxu0
        %v1099 = vadd.f32 %v735, %v1098
        %1100 = vmatmul.f32.gmra.mxu0 %v1075
        %v1101 = vpop.f32.mrf.mxu0
        %v1102 = vadd.f32 %v736, %v1101
        %1103 = vdwg.mxu0
        %1106 = vrot.lane.b32.xlu0 %v988, 112
        %v1107 = vpop.permute.xlu0 %1106
        %1108 = vrot.lane.b32.xlu0 %v990, 112
        %v1109 = vpop.permute.xlu0 %1108
        %v1110 = vsel %vm998, %v988, 0
        %v1112 = vsel %vm998, %v990, 0
        %v1114 = vsel %vm998, %v1107, 0
        %v1116 = vsel %vm998, %v1109, 0
        %1118 = vmatpush.xpose.msra.mxu0 0.0
        %1119 = vmatpush.xpose.msra.mxu0 0.0
        %1120 = vmatpush.xpose.msra.mxu0 0.0
        %1121 = vmatpush.xpose.msra.mxu0 0.0
        %1122 = vmatpush.xpose.msra.mxu0 0.0
        %1123 = vmatpush.xpose.msra.mxu0 0.0
        %1124 = vmatpush.xpose.msra.mxu0 0.0
        %1125 = vmatpush.xpose.msra.mxu0 0.0
        %1126 = vmatpush.xpose.msra.mxu0 0.0
        %1127 = vmatpush.xpose.msra.mxu0 0.0
        %1128 = vmatpush.xpose.msra.mxu0 0.0
        %1129 = vmatpush.xpose.msra.mxu0 0.0
        %1130 = vmatpush.xpose.msra.mxu0 0.0
        %1131 = vmatpush.xpose.msra.mxu0 0.0
        %1132 = vmatpush.xpose.msra.mxu0 %v1116
        %1133 = vmatpush.xpose.msra.mxu0 %v1114
        %1134 = vmatmul.f32.gmra.mxu0 %v1110
        %v1135 = vpop.f32.mrf.mxu0
        %v1136 = vadd.f32 %v735, %v1135
        %1137 = vmatmul.f32.gmra.mxu0 %v1112
        %v1138 = vpop.f32.mrf.mxu0
        %v1139 = vadd.f32 %v736, %v1138
        %1140 = vdwg.mxu0
        %v1141 = vsel %vm998, %v1025, -inf
        %1142 = vmax.xlane.f32.xlu0 %v1141
        %v1143 = vpop.xlane.xlu0 %1142
        %v1144 = vsel %vm998, %v1028, -inf
        %1145 = vmax.xlane.f32.xlu0 %v1144
        %v1146 = vpop.xlane.xlu0 %1145
        %v1147 = vsel %vm998, %v1062, -inf
        %1148 = vmax.xlane.f32.xlu0 %v1147
        %v1149 = vpop.xlane.xlu0 %1148
        %v1150 = vsel %vm998, %v1065, -inf
        %1151 = vmax.xlane.f32.xlu0 %v1150
        %v1152 = vpop.xlane.xlu0 %1151
        %v1153 = vsel %vm998, %v1099, -inf
        %1154 = vmax.xlane.f32.xlu0 %v1153
        %v1155 = vpop.xlane.xlu0 %1154
        %v1156 = vsel %vm998, %v1102, -inf
        %1157 = vmax.xlane.f32.xlu0 %v1156
        %v1158 = vpop.xlane.xlu0 %1157
        %v1159 = vsel %vm998, %v1136, -inf
        %1160 = vmax.xlane.f32.xlu0 %v1159
        %v1161 = vpop.xlane.xlu0 %1160
        %v1162 = vsel %vm998, %v1139, -inf
        %1163 = vmax.xlane.f32.xlu0 %v1162
        %v1164 = vpop.xlane.xlu0 %1163
        %v1165 = vsub.f32 %v1025, %v1143
        %v1166 = vsub.f32 %v1028, %v1146
        %v1167 = vsub.f32 %v1062, %v1149
        %v1168 = vsub.f32 %v1065, %v1152
        %v1169 = vsub.f32 %v1099, %v1155
        %v1170 = vsub.f32 %v1102, %v1158
        %v1171 = vsub.f32 %v1136, %v1161
        %v1172 = vsub.f32 %v1139, %v1164
        %v1173 = vmul.f32 %v1165, 1.442695
        %v1174 = vpow.pop %v1173
        %v1175 = vmul.f32 %v1166, 1.442695
        %v1176 = vpow.pop %v1175
        %v1177 = vmul.f32 %v1167, 1.442695
        %v1178 = vpow.pop %v1177
        %v1179 = vmul.f32 %v1168, 1.442695
        %v1180 = vpow.pop %v1179
        %v1181 = vmul.f32 %v1169, 1.442695
        %v1182 = vpow.pop %v1181
        %v1183 = vmul.f32 %v1170, 1.442695
        %v1184 = vpow.pop %v1183
        %v1185 = vmul.f32 %v1171, 1.442695
        %v1186 = vpow.pop %v1185
        %v1187 = vmul.f32 %v1172, 1.442695
        %v1188 = vpow.pop %v1187
        %v1189 = vsel %vm998, %v1174, 0.0
        %1190 = vadd.xlane.f32.xlu0 %v1189
        %v1191 = vpop.xlane.xlu0 %1190
        %v1192 = vsel %vm998, %v1176, 0.0
        %1193 = vadd.xlane.f32.xlu0 %v1192
        %v1194 = vpop.xlane.xlu0 %1193
        %v1195 = vsel %vm998, %v1178, 0.0
        %1196 = vadd.xlane.f32.xlu0 %v1195
        %v1197 = vpop.xlane.xlu0 %1196
        %v1198 = vsel %vm998, %v1180, 0.0
        %1199 = vadd.xlane.f32.xlu0 %v1198
        %v1200 = vpop.xlane.xlu0 %1199
        %v1201 = vsel %vm998, %v1182, 0.0
        %1202 = vadd.xlane.f32.xlu0 %v1201
        %v1203 = vpop.xlane.xlu0 %1202
        %v1204 = vsel %vm998, %v1184, 0.0
        %1205 = vadd.xlane.f32.xlu0 %v1204
        %v1206 = vpop.xlane.xlu0 %1205
        %v1207 = vsel %vm998, %v1186, 0.0
        %1208 = vadd.xlane.f32.xlu0 %v1207
        %v1209 = vpop.xlane.xlu0 %1208
        %v1210 = vsel %vm998, %v1188, 0.0
        %1211 = vadd.xlane.f32.xlu0 %v1210
        %v1212 = vpop.xlane.xlu0 %1211
        %v1213 = vrcp.pop %v1191
        %v1214 = vmul.f32 %v1191, %v1213
        %v1215 = vsub.f32 1.0, %v1214
        %v1216 = vmul.f32 %v1213, %v1215
        %v1217 = vadd.f32 %v1213, %v1216
        %vm1218 = vweird.f32 %v1191
        %vm1219 = vweird.f32 %v1213
        %vm1220 = vmor %vm1218, %vm1219
        %v1221 = vsel %vm1220, %v1213, %v1217
        %v1222 = vand.u32 2147483647, %v1191
        %vm1223 = vcmp.eq.f32.partialorder %v1222, 8.507059e+37
        %v1224 = vand.u32 %v1191, 2147483648
        %v1225 = vor.u32 1.1754944e-38, %v1224
        %v1226 = vsel %vm1223, %v1225, %v1221
        %v1227 = vrcp.pop %v1194
        %v1228 = vmul.f32 %v1194, %v1227
        %v1229 = vsub.f32 1.0, %v1228
        %v1230 = vmul.f32 %v1227, %v1229
        %v1231 = vadd.f32 %v1227, %v1230
        %vm1232 = vweird.f32 %v1194
        %vm1233 = vweird.f32 %v1227
        %vm1234 = vmor %vm1232, %vm1233
        %v1235 = vsel %vm1234, %v1227, %v1231
        %v1236 = vand.u32 2147483647, %v1194
        %vm1237 = vcmp.eq.f32.partialorder %v1236, 8.507059e+37
        %v1238 = vand.u32 %v1194, 2147483648
        %v1239 = vor.u32 1.1754944e-38, %v1238
        %v1240 = vsel %vm1237, %v1239, %v1235
        %v1241 = vrcp.pop %v1197
        %v1242 = vmul.f32 %v1197, %v1241
        %v1243 = vsub.f32 1.0, %v1242
        %v1244 = vmul.f32 %v1241, %v1243
        %v1245 = vadd.f32 %v1241, %v1244
        %vm1246 = vweird.f32 %v1197
        %vm1247 = vweird.f32 %v1241
        %vm1248 = vmor %vm1246, %vm1247
        %v1249 = vsel %vm1248, %v1241, %v1245
        %v1250 = vand.u32 2147483647, %v1197
        %vm1251 = vcmp.eq.f32.partialorder %v1250, 8.507059e+37
        %v1252 = vand.u32 %v1197, 2147483648
        %v1253 = vor.u32 1.1754944e-38, %v1252
        %v1254 = vsel %vm1251, %v1253, %v1249
        %v1255 = vrcp.pop %v1200
        %v1256 = vmul.f32 %v1200, %v1255
        %v1257 = vsub.f32 1.0, %v1256
        %v1258 = vmul.f32 %v1255, %v1257
        %v1259 = vadd.f32 %v1255, %v1258
        %vm1260 = vweird.f32 %v1200
        %vm1261 = vweird.f32 %v1255
        %vm1262 = vmor %vm1260, %vm1261
        %v1263 = vsel %vm1262, %v1255, %v1259
        %v1264 = vand.u32 2147483647, %v1200
        %vm1265 = vcmp.eq.f32.partialorder %v1264, 8.507059e+37
        %v1266 = vand.u32 %v1200, 2147483648
        %v1267 = vor.u32 1.1754944e-38, %v1266
        %v1268 = vsel %vm1265, %v1267, %v1263
        %v1269 = vrcp.pop %v1203
        %v1270 = vmul.f32 %v1203, %v1269
        %v1271 = vsub.f32 1.0, %v1270
        %v1272 = vmul.f32 %v1269, %v1271
        %v1273 = vadd.f32 %v1269, %v1272
        %vm1274 = vweird.f32 %v1203
        %vm1275 = vweird.f32 %v1269
        %vm1276 = vmor %vm1274, %vm1275
        %v1277 = vsel %vm1276, %v1269, %v1273
        %v1278 = vand.u32 2147483647, %v1203
        %vm1279 = vcmp.eq.f32.partialorder %v1278, 8.507059e+37
        %v1280 = vand.u32 %v1203, 2147483648
        %v1281 = vor.u32 1.1754944e-38, %v1280
        %v1282 = vsel %vm1279, %v1281, %v1277
        %v1283 = vrcp.pop %v1206
        %v1284 = vmul.f32 %v1206, %v1283
        %v1285 = vsub.f32 1.0, %v1284
        %v1286 = vmul.f32 %v1283, %v1285
        %v1287 = vadd.f32 %v1283, %v1286
        %vm1288 = vweird.f32 %v1206
        %vm1289 = vweird.f32 %v1283
        %vm1290 = vmor %vm1288, %vm1289
        %v1291 = vsel %vm1290, %v1283, %v1287
        %v1292 = vand.u32 2147483647, %v1206
        %vm1293 = vcmp.eq.f32.partialorder %v1292, 8.507059e+37
        %v1294 = vand.u32 %v1206, 2147483648
        %v1295 = vor.u32 1.1754944e-38, %v1294
        %v1296 = vsel %vm1293, %v1295, %v1291
        %v1297 = vrcp.pop %v1209
        %v1298 = vmul.f32 %v1209, %v1297
        %v1299 = vsub.f32 1.0, %v1298
        %v1300 = vmul.f32 %v1297, %v1299
        %v1301 = vadd.f32 %v1297, %v1300
        %vm1302 = vweird.f32 %v1209
        %vm1303 = vweird.f32 %v1297
        %vm1304 = vmor %vm1302, %vm1303
        %v1305 = vsel %vm1304, %v1297, %v1301
        %v1306 = vand.u32 2147483647, %v1209
        %vm1307 = vcmp.eq.f32.partialorder %v1306, 8.507059e+37
        %v1308 = vand.u32 %v1209, 2147483648
        %v1309 = vor.u32 1.1754944e-38, %v1308
        %v1310 = vsel %vm1307, %v1309, %v1305
        %v1311 = vrcp.pop %v1212
        %v1312 = vmul.f32 %v1212, %v1311
        %v1313 = vsub.f32 1.0, %v1312
        %v1314 = vmul.f32 %v1311, %v1313
        %v1315 = vadd.f32 %v1311, %v1314
        %vm1316 = vweird.f32 %v1212
        %vm1317 = vweird.f32 %v1311
        %vm1318 = vmor %vm1316, %vm1317
        %v1319 = vsel %vm1318, %v1311, %v1315
        %v1320 = vand.u32 2147483647, %v1212
        %vm1321 = vcmp.eq.f32.partialorder %v1320, 8.507059e+37
        %v1322 = vand.u32 %v1212, 2147483648
        %v1323 = vor.u32 1.1754944e-38, %v1322
        %v1324 = vsel %vm1321, %v1323, %v1319
        %v1325 = vmul.f32 %v1174, %v1226
        %v1326 = vmul.f32 %v1176, %v1240
        %v1327 = vmul.f32 %v1178, %v1254
        %v1328 = vmul.f32 %v1180, %v1268
        %v1329 = vmul.f32 %v1182, %v1282
        %v1330 = vmul.f32 %v1184, %v1296
        %v1331 = vmul.f32 %v1186, %v1310
        %v1332 = vmul.f32 %v1188, %v1324
        %1333 = vrot.lane.b32.xlu0 %v874, 96
        %v1334 = vpop.permute.xlu0 %1333
        %1335 = vrot.lane.b32.xlu0 %v876, 96
        %v1336 = vpop.permute.xlu0 %1335
        %v1340 = vsel %vm998, %v1325, 0
        %v1343 = vsel %vm998, %v1326, 0
        %1345 = vmatpush.msra.mxu0 0.0
        %1346 = vmatpush.msra.mxu0 0.0
        %1347 = vmatpush.msra.mxu0 0.0
        %1348 = vmatpush.msra.mxu0 0.0
        %1349 = vmatpush.msra.mxu0 0.0
        %1350 = vmatpush.msra.mxu0 0.0
        %1351 = vmatpush.msra.mxu0 0.0
        %1352 = vmatpush.msra.mxu0 0.0
        %1353 = vmatpush.msra.mxu0 0.0
        %1354 = vmatpush.msra.mxu0 0.0
        %1355 = vmatpush.msra.mxu0 0.0
        %1356 = vmatpush.msra.mxu0 0.0
        %1357 = vmatpush.msra.mxu0 0.0
        %1358 = vmatpush.msra.mxu0 0.0
        %1359 = vmatpush.msra.mxu0 %v1336
        %1360 = vmatpush.msra.mxu0 %v1334
        %1361 = vmatmul.f32.gmra.mxu0 %v1340
        %v1362 = vpop.f32.mrf.mxu0
        %v1363 = vadd.f32 0.0, %v1362
        %1364 = vmatmul.f32.gmra.mxu0 %v1343
        %v1365 = vpop.f32.mrf.mxu0
        %v1366 = vadd.f32 0.0, %v1365
        %1367 = vdwg.mxu0
        %1368 = vrot.lane.b32.xlu0 %v912, 96
        %v1369 = vpop.permute.xlu0 %1368
        %1370 = vrot.lane.b32.xlu0 %v914, 96
        %v1371 = vpop.permute.xlu0 %1370
        %v1375 = vsel %vm998, %v1327, 0
        %v1378 = vsel %vm998, %v1328, 0
        %1380 = vmatpush.msra.mxu0 0.0
        %1381 = vmatpush.msra.mxu0 0.0
        %1382 = vmatpush.msra.mxu0 0.0
        %1383 = vmatpush.msra.mxu0 0.0
        %1384 = vmatpush.msra.mxu0 0.0
        %1385 = vmatpush.msra.mxu0 0.0
        %1386 = vmatpush.msra.mxu0 0.0
        %1387 = vmatpush.msra.mxu0 0.0
        %1388 = vmatpush.msra.mxu0 0.0
        %1389 = vmatpush.msra.mxu0 0.0
        %1390 = vmatpush.msra.mxu0 0.0
        %1391 = vmatpush.msra.mxu0 0.0
        %1392 = vmatpush.msra.mxu0 0.0
        %1393 = vmatpush.msra.mxu0 0.0
        %1394 = vmatpush.msra.mxu0 %v1371
        %1395 = vmatpush.msra.mxu0 %v1369
        %1396 = vmatmul.f32.gmra.mxu0 %v1375
        %v1397 = vpop.f32.mrf.mxu0
        %v1398 = vadd.f32 0.0, %v1397
        %1399 = vmatmul.f32.gmra.mxu0 %v1378
        %v1400 = vpop.f32.mrf.mxu0
        %v1401 = vadd.f32 0.0, %v1400
        %1402 = vdwg.mxu0
        %1403 = vrot.lane.b32.xlu0 %v950, 96
        %v1404 = vpop.permute.xlu0 %1403
        %1405 = vrot.lane.b32.xlu0 %v952, 96
        %v1406 = vpop.permute.xlu0 %1405
        %v1410 = vsel %vm998, %v1329, 0
        %v1413 = vsel %vm998, %v1330, 0
        %1415 = vmatpush.msra.mxu0 0.0
        %1416 = vmatpush.msra.mxu0 0.0
        %1417 = vmatpush.msra.mxu0 0.0
        %1418 = vmatpush.msra.mxu0 0.0
        %1419 = vmatpush.msra.mxu0 0.0
        %1420 = vmatpush.msra.mxu0 0.0
        %1421 = vmatpush.msra.mxu0 0.0
        %1422 = vmatpush.msra.mxu0 0.0
        %1423 = vmatpush.msra.mxu0 0.0
        %1424 = vmatpush.msra.mxu0 0.0
        %1425 = vmatpush.msra.mxu0 0.0
        %1426 = vmatpush.msra.mxu0 0.0
        %1427 = vmatpush.msra.mxu0 0.0
        %1428 = vmatpush.msra.mxu0 0.0
        %1429 = vmatpush.msra.mxu0 %v1406
        %1430 = vmatpush.msra.mxu0 %v1404
        %1431 = vmatmul.f32.gmra.mxu0 %v1410
        %v1432 = vpop.f32.mrf.mxu0
        %v1433 = vadd.f32 0.0, %v1432
        %1434 = vmatmul.f32.gmra.mxu0 %v1413
        %v1435 = vpop.f32.mrf.mxu0
        %v1436 = vadd.f32 0.0, %v1435
        %1437 = vdwg.mxu0
        %1438 = vrot.lane.b32.xlu0 %v988, 96
        %v1439 = vpop.permute.xlu0 %1438
        %1440 = vrot.lane.b32.xlu0 %v990, 96
        %v1441 = vpop.permute.xlu0 %1440
        %v1445 = vsel %vm998, %v1331, 0
        %v1448 = vsel %vm998, %v1332, 0
        %1450 = vmatpush.msra.mxu0 0.0
        %1451 = vmatpush.msra.mxu0 0.0
        %1452 = vmatpush.msra.mxu0 0.0
        %1453 = vmatpush.msra.mxu0 0.0
        %1454 = vmatpush.msra.mxu0 0.0
        %1455 = vmatpush.msra.mxu0 0.0
        %1456 = vmatpush.msra.mxu0 0.0
        %1457 = vmatpush.msra.mxu0 0.0
        %1458 = vmatpush.msra.mxu0 0.0
        %1459 = vmatpush.msra.mxu0 0.0
        %1460 = vmatpush.msra.mxu0 0.0
        %1461 = vmatpush.msra.mxu0 0.0
        %1462 = vmatpush.msra.mxu0 0.0
        %1463 = vmatpush.msra.mxu0 0.0
        %1464 = vmatpush.msra.mxu0 %v1441
        %1465 = vmatpush.msra.mxu0 %v1439
        %1466 = vmatmul.f32.gmra.mxu0 %v1445
        %v1467 = vpop.f32.mrf.mxu0
        %v1468 = vadd.f32 0.0, %v1467
        %1469 = vmatmul.f32.gmra.mxu0 %v1448
        %v1470 = vpop.f32.mrf.mxu0
        %v1471 = vadd.f32 0.0, %v1470
        %1472 = vdwg.mxu0
        %v1473 = vpack.c.bf16 %v1363, %v1363
        %v1474 = vpack.c.bf16 %v1366, %v1366
        %v1475 = vpack.c.bf16 %v1398, %v1398
        %v1476 = vpack.c.bf16 %v1401, %v1401
        %v1477 = vpack.c.bf16 %v1433, %v1433
        %v1478 = vpack.c.bf16 %v1436, %v1436
        %v1479 = vpack.c.bf16 %v1468, %v1468
        %v1480 = vpack.c.bf16 %v1471, %v1471
        %v1481 = vld [vmem:[%s688] sm:$0xf]
        %v1482 = vld [vmem:[%s688 + $0x4] sm:$0xf]
        %v1483 = vld [vmem:[%s688 + $0x8] sm:$0xf]
        %v1484 = vld [vmem:[%s688 + $0xc] sm:$0xf]
        %v1485 = vld [vmem:[%s688 + $0x10] sm:$0xf]
        %v1486 = vld [vmem:[%s688 + $0x14] sm:$0xf]
        %v1487 = vld [vmem:[%s688 + $0x18] sm:$0xf]
        %v1488 = vld [vmem:[%s688 + $0x1c] sm:$0xf]
        %v1491 = vunpack.c.l.b16 %v1473
        %v1492 = vunpack.c.l.b16 %v1474
        %v1493 = vpack.c.b16 %v1492, %v1491
        %v1496 = vunpack.c.l.b16 %v1481
        %v1497 = vunpack.c.l.b16 %v1482
        %v1498 = vpack.c.b16 %v1497, %v1496
        %v1501 = vsel %vm998, %v1493, 0
        %1503 = vmatpush.bf16.msra.mxu0 0
        %1504 = vmatpush.bf16.msra.mxu0 0
        %1505 = vmatpush.bf16.msra.mxu0 0
        %1506 = vmatpush.bf16.msra.mxu0 0
        %1507 = vmatpush.bf16.msra.mxu0 0
        %1508 = vmatpush.bf16.msra.mxu0 0
        %1509 = vmatpush.bf16.msra.mxu0 0
        %1510 = vmatpush.bf16.msra.mxu0 %v1498
        %1511 = vmatmul.bf16.gmra.mxu0 %v1501
        %v1512 = vpop.f32.mrf.mxu0
        %v1513 = vadd.f32 0.0, %v1512
        %v1514 = vpop.f32.mrf.mxu0
        %v1515 = vadd.f32 0.0, %v1514
        %1516 = vdwg.mxu0
        %v1519 = vunpack.c.l.b16 %v1475
        %v1520 = vunpack.c.l.b16 %v1476
        %v1521 = vpack.c.b16 %v1520, %v1519
        %v1524 = vunpack.c.l.b16 %v1483
        %v1525 = vunpack.c.l.b16 %v1484
        %v1526 = vpack.c.b16 %v1525, %v1524
        %v1529 = vsel %vm998, %v1521, 0
        %1531 = vmatpush.bf16.msra.mxu0 0
        %1532 = vmatpush.bf16.msra.mxu0 0
        %1533 = vmatpush.bf16.msra.mxu0 0
        %1534 = vmatpush.bf16.msra.mxu0 0
        %1535 = vmatpush.bf16.msra.mxu0 0
        %1536 = vmatpush.bf16.msra.mxu0 0
        %1537 = vmatpush.bf16.msra.mxu0 0
        %1538 = vmatpush.bf16.msra.mxu0 %v1526
        %1539 = vmatmul.bf16.gmra.mxu0 %v1529
        %v1540 = vpop.f32.mrf.mxu0
        %v1541 = vadd.f32 0.0, %v1540
        %v1542 = vpop.f32.mrf.mxu0
        %v1543 = vadd.f32 0.0, %v1542
        %1544 = vdwg.mxu0
        %v1547 = vunpack.c.l.b16 %v1477
        %v1548 = vunpack.c.l.b16 %v1478
        %v1549 = vpack.c.b16 %v1548, %v1547
        %v1552 = vunpack.c.l.b16 %v1485
        %v1553 = vunpack.c.l.b16 %v1486
        %v1554 = vpack.c.b16 %v1553, %v1552
        %v1557 = vsel %vm998, %v1549, 0
        %1559 = vmatpush.bf16.msra.mxu0 0
        %1560 = vmatpush.bf16.msra.mxu0 0
        %1561 = vmatpush.bf16.msra.mxu0 0
        %1562 = vmatpush.bf16.msra.mxu0 0
        %1563 = vmatpush.bf16.msra.mxu0 0
        %1564 = vmatpush.bf16.msra.mxu0 0
        %1565 = vmatpush.bf16.msra.mxu0 0
        %1566 = vmatpush.bf16.msra.mxu0 %v1554
        %1567 = vmatmul.bf16.gmra.mxu0 %v1557
        %v1568 = vpop.f32.mrf.mxu0
        %v1569 = vadd.f32 0.0, %v1568
        %v1570 = vpop.f32.mrf.mxu0
        %v1571 = vadd.f32 0.0, %v1570
        %1572 = vdwg.mxu0
        %v1575 = vunpack.c.l.b16 %v1479
        %v1576 = vunpack.c.l.b16 %v1480
        %v1577 = vpack.c.b16 %v1576, %v1575
        %v1580 = vunpack.c.l.b16 %v1487
        %v1581 = vunpack.c.l.b16 %v1488
        %v1582 = vpack.c.b16 %v1581, %v1580
        %v1585 = vsel %vm998, %v1577, 0
        %1587 = vmatpush.bf16.msra.mxu0 0
        %1588 = vmatpush.bf16.msra.mxu0 0
        %1589 = vmatpush.bf16.msra.mxu0 0
        %1590 = vmatpush.bf16.msra.mxu0 0
        %1591 = vmatpush.bf16.msra.mxu0 0
        %1592 = vmatpush.bf16.msra.mxu0 0
        %1593 = vmatpush.bf16.msra.mxu0 0
        %1594 = vmatpush.bf16.msra.mxu0 %v1582
        %1595 = vmatmul.bf16.gmra.mxu0 %v1585
        %v1596 = vpop.f32.mrf.mxu0
        %v1597 = vadd.f32 0.0, %v1596
        %v1598 = vpop.f32.mrf.mxu0
        %v1599 = vadd.f32 0.0, %v1598
        %1600 = vdwg.mxu0
        %v1601 = vsel %vm739, %v1513, 0.0
        %v1602 = vsel %vm739, %v1541, 0.0
        %v1603 = vadd.f32 %v1601, %v1602
        %v1604 = vsel %vm739, %v1569, 0.0
        %v1605 = vadd.f32 %v1603, %v1604
        %v1606 = vsel %vm739, %v1597, 0.0
        %v1607 = vadd.f32 %v1605, %v1606
        %v1608 = vsel %vm739, %v1515, 0.0
        %v1609 = vsel %vm739, %v1543, 0.0
        %v1610 = vadd.f32 %v1608, %v1609
        %v1611 = vsel %vm739, %v1571, 0.0
        %v1612 = vadd.f32 %v1610, %v1611
        %v1613 = vsel %vm739, %v1599, 0.0
        %v1614 = vadd.f32 %v1612, %v1613
        %v1615 = vadd.f32 %v726, %v1607
        %v1616 = vadd.f32 %v727, %v1614
        %v1617 = vld [vmem:[%s691] sm:$0x1]
        %v1619 = vperm.slane %v1617, 0
        %v1621 = vadd.f32 %v1615, %v1619
        %v1622 = vadd.f32 %v1616, %v1619
        %v1623 = vld [vmem:[%s694] sm:$0x1]
        %v1624 = vld [vmem:[%s697] sm:$0x1]
        %v1625 = vsel %vm739, %v1621, 0.0
        %1626 = vadd.xlane.f32.xlu0 %v1625
        %v1627 = vpop.xlane.xlu0 %1626
        %v1628 = vsel %vm739, %v1622, 0.0
        %1629 = vadd.xlane.f32.xlu0 %v1628
        %v1630 = vpop.xlane.xlu0 %1629
        %v1631 = vmul.f32 %v1621, %v1621
        %v1632 = vmul.f32 %v1622, %v1622
        %v1633 = vsel %vm739, %v1631, 0.0
        %1634 = vadd.xlane.f32.xlu0 %v1633
        %v1635 = vpop.xlane.xlu0 %1634
        %v1636 = vsel %vm739, %v1632, 0.0
        %1637 = vadd.xlane.f32.xlu0 %v1636
        %v1638 = vpop.xlane.xlu0 %1637
        %v1639 = vmul.f32 %v1627, 0.015625
        %v1640 = vmul.f32 %v1630, 0.015625
        %v1641 = vmul.f32 %v1635, 0.015625
        %v1642 = vmul.f32 %v1638, 0.015625
        %v1643 = vmul.f32 %v1639, %v1639
        %v1644 = vmul.f32 %v1640, %v1640
        %v1645 = vsub.f32 %v1641, %v1643
        %v1646 = vsub.f32 %v1642, %v1644
        %v1647 = vsub.f32 %v1621, %v1639
        %v1648 = vsub.f32 %v1622, %v1640
        %v1649 = vadd.f32 %v1645, 1e-05
        %v1650 = vadd.f32 %v1646, 1e-05
        %v1651 = vrsqrt.pop %v1649
        %v1652 = vmul.f32 %v1651, %v1649
        %v1653 = vmul.f32 %v1652, %v1651
        %v1654 = vmul.f32 0.5, %v1653
        %v1655 = vsub.f32 1.5, %v1654
        %v1656 = vmul.f32 %v1651, %v1655
        %vm1657 = vweird.f32 %v1649
        %vm1658 = vweird.f32 %v1651
        %vm1659 = vmor %vm1657, %vm1658
        %v1660 = vsel %vm1659, %v1651, %v1656
        %v1661 = vrsqrt.pop %v1650
        %v1662 = vmul.f32 %v1661, %v1650
        %v1663 = vmul.f32 %v1662, %v1661
        %v1664 = vmul.f32 0.5, %v1663
        %v1665 = vsub.f32 1.5, %v1664
        %v1666 = vmul.f32 %v1661, %v1665
        %vm1667 = vweird.f32 %v1650
        %vm1668 = vweird.f32 %v1661
        %vm1669 = vmor %vm1667, %vm1668
        %v1670 = vsel %vm1669, %v1661, %v1666
        %v1671 = vmul.f32 %v1647, %v1660
        %v1672 = vmul.f32 %v1648, %v1670
        %v1674 = vperm.slane %v1623, 0
        %v1676 = vmul.f32 %v1671, %v1674
        %v1677 = vmul.f32 %v1672, %v1674
        %v1679 = vperm.slane %v1624, 0
        %v1681 = vadd.f32 %v1676, %v1679
        %v1682 = vadd.f32 %v1677, %v1679
        %v1683 = vpack.c.bf16 %v1682, %v1681
        %v1684 = vld [vmem:[%s702] sm:$0xff]
        %v1685 = vld [vmem:[%s702 + $0x8] sm:$0xff]
        %v1686 = vld [vmem:[%s702 + $0x10] sm:$0xff]
        %v1687 = vld [vmem:[%s702 + $0x18] sm:$0xff]
        %v1688 = vld [vmem:[%s702 + $0x20] sm:$0xff]
        %v1689 = vld [vmem:[%s702 + $0x28] sm:$0xff]
        %v1690 = vld [vmem:[%s702 + $0x30] sm:$0xff]
        %v1691 = vld [vmem:[%s702 + $0x38] sm:$0xff]
        %v1692 = vld [vmem:[%s706] sm:$0x3]
        %v1694 = vperm.slane %v1692, 0
        %v1695 = vperm.slane %v1692, 1
        %v1706 = vunpack.c.l.b16 %v1684
        %v1707 = vunpack.c.h.b16 %v1684
        %v1708 = vunpack.c.l.b16 %v1685
        %v1709 = vunpack.c.h.b16 %v1685
        %v1710 = vunpack.c.l.b16 %v1686
        %v1711 = vunpack.c.h.b16 %v1686
        %v1712 = vunpack.c.l.b16 %v1687
        %v1713 = vunpack.c.h.b16 %v1687
        %v1714 = vunpack.c.l.b16 %v1688
        %v1715 = vunpack.c.h.b16 %v1688
        %v1716 = vunpack.c.l.b16 %v1689
        %v1717 = vunpack.c.h.b16 %v1689
        %v1718 = vunpack.c.l.b16 %v1690
        %v1719 = vunpack.c.h.b16 %v1690
        %v1720 = vunpack.c.l.b16 %v1691
        %v1721 = vunpack.c.h.b16 %v1691
        %v1722 = vpack.c.b16 %v1708, %v1706
        %v1723 = vpack.c.b16 %v1709, %v1707
        %v1724 = vpack.c.b16 %v1712, %v1710
        %v1725 = vpack.c.b16 %v1713, %v1711
        %v1726 = vpack.c.b16 %v1716, %v1714
        %v1727 = vpack.c.b16 %v1717, %v1715
        %v1728 = vpack.c.b16 %v1720, %v1718
        %v1729 = vpack.c.b16 %v1721, %v1719
        %v1739 = vsel %vm739, %v1683, 0
        %1741 = vmatpush.bf16.msra.mxu0 0
        %1742 = vmatpush.bf16.msra.mxu0 0
        %1743 = vmatpush.bf16.msra.mxu0 0
        %1744 = vmatpush.bf16.msra.mxu0 0
        %1745 = vmatpush.bf16.msra.mxu0 %v1728
        %1746 = vmatpush.bf16.msra.mxu0 %v1726
        %1747 = vmatpush.bf16.msra.mxu0 %v1724
        %1748 = vmatpush.bf16.msra.mxu0 %v1722
        %1749 = vmatmul.bf16.gmra.mxu0 %v1739
        %v1750 = vpop.f32.mrf.mxu0
        %v1751 = vadd.f32 %v1694, %v1750
        %v1752 = vpop.f32.mrf.mxu0
        %v1753 = vadd.f32 %v1694, %v1752
        %1754 = vdwg.mxu0
        %1755 = vmatpush.bf16.msra.mxu0 0
        %1756 = vmatpush.bf16.msra.mxu0 0
        %1757 = vmatpush.bf16.msra.mxu0 0
        %1758 = vmatpush.bf16.msra.mxu0 0
        %1759 = vmatpush.bf16.msra.mxu0 %v1729
        %1760 = vmatpush.bf16.msra.mxu0 %v1727
        %1761 = vmatpush.bf16.msra.mxu0 %v1725
        %1762 = vmatpush.bf16.msra.mxu0 %v1723
        %1763 = vmatmul.bf16.gmra.mxu0 %v1739
        %v1764 = vpop.f32.mrf.mxu0
        %v1765 = vadd.f32 %v1695, %v1764
        %v1766 = vpop.f32.mrf.mxu0
        %v1767 = vadd.f32 %v1695, %v1766
        %1768 = vdwg.mxu0
        %v1769 = vmax.f32 %v1751, 0.0
        %v1770 = vmax.f32 %v1765, 0.0
        %v1771 = vmax.f32 %v1753, 0.0
        %v1772 = vmax.f32 %v1767, 0.0
        %v1773 = vpack.c.bf16 %v1771, %v1769
        %v1774 = vpack.c.bf16 %v1772, %v1770
        %v1775 = vld [vmem:[%s711] sm:$0xf]
        %v1776 = vld [vmem:[%s711 + $0x4] sm:$0xf]
        %v1777 = vld [vmem:[%s711 + $0x8] sm:$0xf]
        %v1778 = vld [vmem:[%s711 + $0xc] sm:$0xf]
        %v1779 = vld [vmem:[%s711 + $0x10] sm:$0xf]
        %v1780 = vld [vmem:[%s711 + $0x14] sm:$0xf]
        %v1781 = vld [vmem:[%s711 + $0x18] sm:$0xf]
        %v1782 = vld [vmem:[%s711 + $0x1c] sm:$0xf]
        %v1783 = vld [vmem:[%s711 + $0x20] sm:$0xf]
        %v1784 = vld [vmem:[%s711 + $0x24] sm:$0xf]
        %v1785 = vld [vmem:[%s711 + $0x28] sm:$0xf]
        %v1786 = vld [vmem:[%s711 + $0x2c] sm:$0xf]
        %v1787 = vld [vmem:[%s711 + $0x30] sm:$0xf]
        %v1788 = vld [vmem:[%s711 + $0x34] sm:$0xf]
        %v1789 = vld [vmem:[%s711 + $0x38] sm:$0xf]
        %v1790 = vld [vmem:[%s711 + $0x3c] sm:$0xf]
        %v1791 = vld [vmem:[%s711 + $0x40] sm:$0xf]
        %v1792 = vld [vmem:[%s711 + $0x44] sm:$0xf]
        %v1793 = vld [vmem:[%s711 + $0x48] sm:$0xf]
        %v1794 = vld [vmem:[%s711 + $0x4c] sm:$0xf]
        %v1795 = vld [vmem:[%s711 + $0x50] sm:$0xf]
        %v1796 = vld [vmem:[%s711 + $0x54] sm:$0xf]
        %v1797 = vld [vmem:[%s711 + $0x58] sm:$0xf]
        %v1798 = vld [vmem:[%s711 + $0x5c] sm:$0xf]
        %v1799 = vld [vmem:[%s711 + $0x60] sm:$0xf]
        %v1800 = vld [vmem:[%s711 + $0x64] sm:$0xf]
        %v1801 = vld [vmem:[%s711 + $0x68] sm:$0xf]
        %v1802 = vld [vmem:[%s711 + $0x6c] sm:$0xf]
        %v1803 = vld [vmem:[%s711 + $0x70] sm:$0xf]
        %v1804 = vld [vmem:[%s711 + $0x74] sm:$0xf]
        %v1805 = vld [vmem:[%s711 + $0x78] sm:$0xf]
        %v1806 = vld [vmem:[%s711 + $0x7c] sm:$0xf]
        %v1807 = vld [vmem:[%s714] sm:$0x1]
        %v1809 = vperm.slane %v1807, 0
        %v1843 = vunpack.c.l.b16 %v1775
        %v1844 = vunpack.c.l.b16 %v1776
        %v1845 = vunpack.c.l.b16 %v1777
        %v1846 = vunpack.c.l.b16 %v1778
        %v1847 = vunpack.c.l.b16 %v1779
        %v1848 = vunpack.c.l.b16 %v1780
        %v1849 = vunpack.c.l.b16 %v1781
        %v1850 = vunpack.c.l.b16 %v1782
        %v1851 = vunpack.c.l.b16 %v1783
        %v1852 = vunpack.c.l.b16 %v1784
        %v1853 = vunpack.c.l.b16 %v1785
        %v1854 = vunpack.c.l.b16 %v1786
        %v1855 = vunpack.c.l.b16 %v1787
        %v1856 = vunpack.c.l.b16 %v1788
        %v1857 = vunpack.c.l.b16 %v1789
        %v1858 = vunpack.c.l.b16 %v1790
        %v1859 = vunpack.c.l.b16 %v1791
        %v1860 = vunpack.c.l.b16 %v1792
        %v1861 = vunpack.c.l.b16 %v1793
        %v1862 = vunpack.c.l.b16 %v1794
        %v1863 = vunpack.c.l.b16 %v1795
        %v1864 = vunpack.c.l.b16 %v1796
        %v1865 = vunpack.c.l.b16 %v1797
        %v1866 = vunpack.c.l.b16 %v1798
        %v1867 = vunpack.c.l.b16 %v1799
        %v1868 = vunpack.c.l.b16 %v1800
        %v1869 = vunpack.c.l.b16 %v1801
        %v1870 = vunpack.c.l.b16 %v1802
        %v1871 = vunpack.c.l.b16 %v1803
        %v1872 = vunpack.c.l.b16 %v1804
        %v1873 = vunpack.c.l.b16 %v1805
        %v1874 = vunpack.c.l.b16 %v1806
        %v1875 = vpack.c.b16 %v1844, %v1843
        %v1876 = vpack.c.b16 %v1846, %v1845
        %v1877 = vpack.c.b16 %v1848, %v1847
        %v1878 = vpack.c.b16 %v1850, %v1849
        %v1879 = vpack.c.b16 %v1852, %v1851
        %v1880 = vpack.c.b16 %v1854, %v1853
        %v1881 = vpack.c.b16 %v1856, %v1855
        %v1882 = vpack.c.b16 %v1858, %v1857
        %v1883 = vpack.c.b16 %v1860, %v1859
        %v1884 = vpack.c.b16 %v1862, %v1861
        %v1885 = vpack.c.b16 %v1864, %v1863
        %v1886 = vpack.c.b16 %v1866, %v1865
        %v1887 = vpack.c.b16 %v1868, %v1867
        %v1888 = vpack.c.b16 %v1870, %v1869
        %v1889 = vpack.c.b16 %v1872, %v1871
        %v1890 = vpack.c.b16 %v1874, %v1873
        %1907 = vmatpush.bf16.msra.mxu0 %v1882
        %1908 = vmatpush.bf16.msra.mxu0 %v1881
        %1909 = vmatpush.bf16.msra.mxu0 %v1880
        %1910 = vmatpush.bf16.msra.mxu0 %v1879
        %1911 = vmatpush.bf16.msra.mxu0 %v1878
        %1912 = vmatpush.bf16.msra.mxu0 %v1877
        %1913 = vmatpush.bf16.msra.mxu0 %v1876
        %1914 = vmatpush.bf16.msra.mxu0 %v1875
        %1915 = vmatmul.bf16.gmra.mxu0 %v1773
        %v1916 = vpop.f32.mrf.mxu0
        %v1917 = vadd.f32 %v1809, %v1916
        %v1918 = vpop.f32.mrf.mxu0
        %v1919 = vadd.f32 %v1809, %v1918
        %1920 = vdwg.mxu0
        %1921 = vmatpush.bf16.msra.mxu0 %v1890
        %1922 = vmatpush.bf16.msra.mxu0 %v1889
        %1923 = vmatpush.bf16.msra.mxu0 %v1888
        %1924 = vmatpush.bf16.msra.mxu0 %v1887
        %1925 = vmatpush.bf16.msra.mxu0 %v1886
        %1926 = vmatpush.bf16.msra.mxu0 %v1885
        %1927 = vmatpush.bf16.msra.mxu0 %v1884
        %1928 = vmatpush.bf16.msra.mxu0 %v1883
        %1929 = vmatmul.bf16.gmra.mxu0 %v1774
        %v1930 = vpop.f32.mrf.mxu0
        %v1931 = vadd.f32 %v1917, %v1930
        %v1932 = vpop.f32.mrf.mxu0
        %v1933 = vadd.f32 %v1919, %v1932
        %1934 = vdwg.mxu0
        %v1935 = vadd.f32 %v1621, %v1931
        %v1936 = vadd.f32 %v1622, %v1933
        %1937 = vst.msk [vmem:[#allocation2] sm:$0xff] %vm739, %v1935
        %1938 = vst.msk [vmem:[#allocation2 + $0x8] sm:$0xff] %vm739, %v1936
        %p1939 = scmp.eq.s32.totalorder %s35, 7
        // Predicated region
        $region89: #{transformer_language_model.1} parent=83 // pred_check
          %p1940 = pneg %p1939
        $region90: #{transformer_language_model.1} parent=83 // pred_check_branch
          %1942 = sbr.rel (%p1940) target = $region92
        $region91: #{transformer_language_model.1} parent=83 // pred_region
          %v1943 = vld [vmem:[%s12] sm:$0x1]
          %v1944 = vld [vmem:[%s13] sm:$0x1]
          %v1945 = vsel %vm739, %v1935, 0.0
          %1946 = vadd.xlane.f32.xlu0 %v1945
          %v1947 = vpop.xlane.xlu0 %1946
          %v1948 = vsel %vm739, %v1936, 0.0
          %1949 = vadd.xlane.f32.xlu0 %v1948
          %v1950 = vpop.xlane.xlu0 %1949
          %v1951 = vmul.f32 %v1935, %v1935
          %v1952 = vmul.f32 %v1936, %v1936
          %v1953 = vsel %vm739, %v1951, 0.0
          %1954 = vadd.xlane.f32.xlu0 %v1953
          %v1955 = vpop.xlane.xlu0 %1954
          %v1956 = vsel %vm739, %v1952, 0.0
          %1957 = vadd.xlane.f32.xlu0 %v1956
          %v1958 = vpop.xlane.xlu0 %1957
          %v1959 = vmul.f32 %v1947, 0.015625
          %v1960 = vmul.f32 %v1950, 0.015625
          %v1961 = vmul.f32 %v1955, 0.015625
          %v1962 = vmul.f32 %v1958, 0.015625
          %v1963 = vmul.f32 %v1959, %v1959
          %v1964 = vmul.f32 %v1960, %v1960
          %v1965 = vsub.f32 %v1961, %v1963
          %v1966 = vsub.f32 %v1962, %v1964
          %v1967 = vsub.f32 %v1935, %v1959
          %v1968 = vsub.f32 %v1936, %v1960
          %v1969 = vadd.f32 %v1965, 1e-05
          %v1970 = vadd.f32 %v1966, 1e-05
          %v1971 = vrsqrt.pop %v1969
          %v1972 = vmul.f32 %v1971, %v1969
          %v1973 = vmul.f32 %v1972, %v1971
          %v1974 = vmul.f32 0.5, %v1973
          %v1975 = vsub.f32 1.5, %v1974
          %v1976 = vmul.f32 %v1971, %v1975
          %vm1977 = vweird.f32 %v1969
          %vm1978 = vweird.f32 %v1971
          %vm1979 = vmor %vm1977, %vm1978
          %v1980 = vsel %vm1979, %v1971, %v1976
          %v1981 = vrsqrt.pop %v1970
          %v1982 = vmul.f32 %v1981, %v1970
          %v1983 = vmul.f32 %v1982, %v1981
          %v1984 = vmul.f32 0.5, %v1983
          %v1985 = vsub.f32 1.5, %v1984
          %v1986 = vmul.f32 %v1981, %v1985
          %vm1987 = vweird.f32 %v1970
          %vm1988 = vweird.f32 %v1981
          %vm1989 = vmor %vm1987, %vm1988
          %v1990 = vsel %vm1989, %v1981, %v1986
          %v1991 = vmul.f32 %v1967, %v1980
          %v1992 = vmul.f32 %v1968, %v1990
          %v1994 = vperm.slane %v1943, 0
          %v1996 = vmul.f32 %v1991, %v1994
          %v1997 = vmul.f32 %v1992, %v1994
          %v1999 = vperm.slane %v1944, 0
          %v2001 = vadd.f32 %v1996, %v1999
          %v2002 = vadd.f32 %v1997, %v1999
          %v2003 = vpack.c.bf16 %v2002, %v2001
          %v2004 = vld [vmem:[%s14] sm:$0xf]
          %v2005 = vld [vmem:[%s14 + $0x4] sm:$0xf]
          %v2006 = vld [vmem:[%s14 + $0x8] sm:$0xf]
          %v2007 = vld [vmem:[%s14 + $0xc] sm:$0xf]
          %v2008 = vld [vmem:[%s14 + $0x10] sm:$0xf]
          %v2009 = vld [vmem:[%s14 + $0x14] sm:$0xf]
          %v2010 = vld [vmem:[%s14 + $0x18] sm:$0xf]
          %v2011 = vld [vmem:[%s14 + $0x1c] sm:$0xf]
          %v2012 = vld [vmem:[%s15] sm:$0x1]
          %v2014 = vperm.slane %v2012, 0
          %v2024 = vunpack.c.l.b16 %v2004
          %v2025 = vunpack.c.l.b16 %v2005
          %v2026 = vunpack.c.l.b16 %v2006
          %v2027 = vunpack.c.l.b16 %v2007
          %v2028 = vunpack.c.l.b16 %v2008
          %v2029 = vunpack.c.l.b16 %v2009
          %v2030 = vunpack.c.l.b16 %v2010
          %v2031 = vunpack.c.l.b16 %v2011
          %v2032 = vpack.c.b16 %v2025, %v2024
          %v2033 = vpack.c.b16 %v2027, %v2026
          %v2034 = vpack.c.b16 %v2029, %v2028
          %v2035 = vpack.c.b16 %v2031, %v2030
          %v2041 = vsel %vm739, %v2003, 0
          %2043 = vmatpush.bf16.msra.mxu0 0
          %2044 = vmatpush.bf16.msra.mxu0 0
          %2045 = vmatpush.bf16.msra.mxu0 0
          %2046 = vmatpush.bf16.msra.mxu0 0
          %2047 = vmatpush.bf16.msra.mxu0 %v2035
          %2048 = vmatpush.bf16.msra.mxu0 %v2034
          %2049 = vmatpush.bf16.msra.mxu0 %v2033
          %2050 = vmatpush.bf16.msra.mxu0 %v2032
          %2051 = vmatmul.bf16.gmra.mxu0 %v2041
          %v2052 = vpop.f32.mrf.mxu0
          %v2053 = vadd.f32 %v2014, %v2052
          %v2054 = vpop.f32.mrf.mxu0
          %v2055 = vadd.f32 %v2014, %v2054
          %2056 = vdwg.mxu0
          %2057 = vst [vmem:[%s666] sm:$0xff] %v2053
          %2058 = vst [vmem:[%s666 + $0x8] sm:$0xff] %v2055
        $region92: #{transformer_language_model.1} parent=83 // pred_fallthru
          _
        %s2059 = sand.u32 %s446, 1
        %s2060 = scalar_lea.sflag [#allocation4], %s2059
        %s2061 = sand.u32 %s446, 1
        %s2062 = smul.addr %s2061, 16
        %s2063 = scalar_lea.vmem [#allocation3], %s2062
        // Predicated region
        $region93: #{transformer_language_model.1} parent=83 // pred_check
          %p2064 = pneg %p456
        $region94: #{transformer_language_model.1} parent=83 // pred_check_branch
          %2066 = sbr.rel (%p2064) target = $region96
        $region95: #{transformer_language_model.1} parent=83 // pred_region
          %s2067 = smul.u32 2, %s34
          %2069 = vsyncadd %s2060, 0
          %s2070 = smul.addr %s2067, 8
          %s2071 = scalar_lea.hbm %s16, %s2070
          %s2072 = sshll.u32 %s2063, 4
          %s2073 = int_to_ptr.vmem [resolvable:$true] %s2072
          %s2074 = sshll.u32 %s2071, 4
          %s2075 = int_to_ptr.hbm [resolvable:$true] %s2074
          %2080 = dma.vmem_to_hbm [thread:$0]  %s2073, 256, %s2075, %s2060, 128, 128, 8
        $region96: #{transformer_language_model.1} parent=83 // pred_fallthru
          _
      $region84: #{transformer_language_model.1} parent=5 // pred_fallthru
        _
      %p2081 = scmp.le.s32.totalorder 2, %s25
      // Predicated region
      $region97: #{transformer_language_model.1} parent=5 // pred_check
        %p2082 = pneg %p2081
      $region98: #{transformer_language_model.1} parent=5 // pred_check_branch
        %2084 = sbr.rel (%p2082) target = $region100
      $region99: #{transformer_language_model.1} parent=5 // pred_region
        %s2085 = ssub.s32 %s25, 2
        // Predicated region
        $region101: #{transformer_language_model.1} parent=99 // pred_check
          %p2086 = pneg %p462
        $region102: #{transformer_language_model.1} parent=99 // pred_check_branch
          %2088 = sbr.rel (%p2086) target = $region104
        $region103: #{transformer_language_model.1} parent=99 // pred_region
          %s2089 = sand.u32 %s447, 1
          %s2090 = scalar_lea.sflag [#allocation4], %s2089
          %s2091 = sand.u32 %s447, 1
          %s2092 = smul.addr %s2091, 16
          %s2093 = scalar_lea.vmem [#allocation3], %s2092
          %2095 = dma.done %s2090, 256
        $region104: #{transformer_language_model.1} parent=99 // pred_fallthru
          _
      $region100: #{transformer_language_model.1} parent=5 // pred_fallthru
        _
    $region6: #{transformer_language_model.1} parent=1 // loop_footer
      %s29 = sadd.s32 1, %s25
    $region7: #{transformer_language_model.1} parent=1 // loop_footer_branch
      %24 = sbr.rel target = $region3
    $region8: #{transformer_language_model.1} parent=1 // loop_exit
      _
    %2096 = vsyncpa [#allocation4], 1
    %s2097 = scalar_lea.sflag [#allocation4], 1
    %2098 = vsyncpa %s2097, 1

</llo_original>
